<compile_context>
chip_gen: v7x
topology: tpu7x:2x2x1
jax: 0.10.0
libtpu: 0.0.40
codegen_flags: <defaults>
</compile_context>

<pallas_src>
import functools

import jax
import jax.numpy as jnp
from jax.experimental import pallas as pl
from jax.experimental.pallas import tpu as pltpu


# ---------------------------------------------------------------------------
# Kernels
# ---------------------------------------------------------------------------
def _causal_mlp_kernel_fused(x_ref, w1_ref, b1_ref, w2_ref, b2_ref,
                             w3_ref, b3_ref, out_ref):
    """Fused (policy || value) MLP: 3 bf16 matmuls with f32 accumulation."""
    x = x_ref[...].astype(jnp.bfloat16)                       # cast in-kernel
    h = jnp.dot(x, w1_ref[...],
                preferred_element_type=jnp.float32) + b1_ref[...]
    h = jnp.maximum(h, 0.0).astype(jnp.bfloat16)              # ReLU in f32
    h = jnp.dot(h, w2_ref[...],
                preferred_element_type=jnp.float32) + b2_ref[...]
    h = jnp.maximum(h, 0.0).astype(jnp.bfloat16)
    out = jnp.dot(h, w3_ref[...],
                  preferred_element_type=jnp.float32) + b3_ref[...]
    out_ref[...] = out.astype(out_ref.dtype)                  # lane-dense (TB, 128)


def _causal_mlp_kernel_split_l2(x_ref, w1_ref, b1_ref, w2p_ref, b2p_ref,
                                w2v_ref, b2v_ref, w3_ref, b3_ref, out_ref):
    """Same math, but layer 2 split per head (128-wide-MXU generations, v2..v5):
    avoids feeding the zero blocks of the block-diagonal 512x256 matmul."""
    x = x_ref[...].astype(jnp.bfloat16)
    h = jnp.dot(x, w1_ref[...],
                preferred_element_type=jnp.float32) + b1_ref[...]
    h = jnp.maximum(h, 0.0).astype(jnp.bfloat16)              # (TB, 512)
    h1 = w2p_ref.shape[0]                                     # 256 (lane aligned)
    gp = jnp.dot(h[:, :h1], w2p_ref[...],
                 preferred_element_type=jnp.float32) + b2p_ref[...]
    gv = jnp.dot(h[:, h1:], w2v_ref[...],
                 preferred_element_type=jnp.float32) + b2v_ref[...]
    g = jnp.concatenate([jnp.maximum(gp, 0.0), jnp.maximum(gv, 0.0)],
                        axis=-1).astype(jnp.bfloat16)         # (TB, 256)
    out = jnp.dot(g, w3_ref[...],
                  preferred_element_type=jnp.float32) + b3_ref[...]
    out_ref[...] = out.astype(out_ref.dtype)


# ---------------------------------------------------------------------------
# Parameters
# ---------------------------------------------------------------------------
def init_params(key, input_size, action_size, h1=256, h2=128):
    """Deterministic synthetic parameters, same shapes as the torch module
    (stored pre-transposed as (fan_in, fan_out))."""
    ks = jax.random.split(key, 12)

    def lin(kw, kb, fan_in, fan_out):
        scale = 1.0 / jnp.sqrt(jnp.float32(fan_in))
        w = jax.random.uniform(kw, (fan_in, fan_out), jnp.float32, -scale, scale)
        b = jax.random.uniform(kb, (1, fan_out), jnp.float32, -scale, scale)
        return w, b

    w1p, b1p = lin(ks[0], ks[1], input_size, h1)
    w2p, b2p = lin(ks[2], ks[3], h1, h2)
    w3p, b3p = lin(ks[4], ks[5], h2, action_size)
    w1v, b1v = lin(ks[6], ks[7], input_size, h1)
    w2v, b2v = lin(ks[8], ks[9], h1, h2)
    w3v, b3v = lin(ks[10], ks[11], h2, 1)
    return dict(
        w1p=w1p, b1p=b1p, w2p=w2p, b2p=b2p, w3p=w3p, b3p=b3p,
        w1v=w1v, b1v=b1v, w2v=w2v, b2v=b2v, w3v=w3v, b3v=b3v,
    )


def fuse_params(params, action_size, *, split_layer2=False):
    """Fuse the two heads into one wide MLP; weights -> bf16, biases stay f32.

    If split_layer2 is True, layer 2 is kept per-head (v2..v5 MXU width 128);
    otherwise it is folded into a block-diagonal (512, 256) matrix.
    """
    h1 = params["w2p"].shape[0]   # 256
    h2 = params["w2p"].shape[1]   # 128

    # Layer 1: simple concat along output dim (same input feeds both heads).
    w1 = jnp.concatenate([params["w1p"], params["w1v"]], axis=1)      # (in, 2*h1)
    b1 = jnp.concatenate([params["b1p"], params["b1v"]], axis=1)      # (1, 2*h1)

    # Layer 3: block-diagonal, output padded to a lane-dense 128-wide slab:
    # columns [0, A) = pi logits, column A = value, rest = zero padding.
    n_out = action_size + 1
    n_pad = max(128, ((n_out + 127) // 128) * 128)
    w3 = jnp.zeros((2 * h2, n_pad), jnp.float32)
    w3 = w3.at[:h2, :action_size].set(params["w3p"])
    w3 = w3.at[h2:, action_size:action_size + 1].set(params["w3v"])
    b3 = jnp.zeros((1, n_pad), jnp.float32)
    b3 = b3.at[:, :action_size].set(params["b3p"])
    b3 = b3.at[:, action_size:action_size + 1].set(params["b3v"])

    fused = dict(w1=w1.astype(jnp.bfloat16), b1=b1,
                 w3=w3.astype(jnp.bfloat16), b3=b3)

    if split_layer2:
        fused.update(
            w2p=params["w2p"].astype(jnp.bfloat16), b2p=params["b2p"],
            w2v=params["w2v"].astype(jnp.bfloat16), b2v=params["b2v"],
        )
    else:
        # Layer 2: block-diagonal so each head only sees its own activations.
        w2 = jnp.zeros((2 * h1, 2 * h2), jnp.float32)
        w2 = w2.at[:h1, :h2].set(params["w2p"])
        w2 = w2.at[h1:, h2:].set(params["w2v"])
        b2 = jnp.concatenate([params["b2p"], params["b2v"]], axis=1)
        fused.update(w2=w2.astype(jnp.bfloat16), b2=b2)
    return fused


# ---------------------------------------------------------------------------
# Per-generation kernel configuration (trace-time / host-side decisions)
# ---------------------------------------------------------------------------
def tpu_kernel_config():
    """Pick layer-2 fusion mode and grid sharding from the attached TPU."""
    kind = ""
    try:
        kind = (getattr(jax.devices()[0], "device_kind", "") or "").lower()
    except Exception:
        pass
    # v2..v5 have a 128-wide MXU: split layer 2 per head there.
    split_layer2 = any(t in kind for t in ("v2", "v3", "v4", "v5"))
    # v7x has 2 TensorCores per chip: force >=2 "parallel" grid steps.
    num_cores = 2 if ("v7" in kind or "7x" in kind) else 1
    return dict(split_layer2=split_layer2, tb_max=1024, num_cores=num_cores)


def _round_up(x, m):
    return ((x + m - 1) // m) * m


def _choose_tiling(batch, tb_max, num_cores):
    """Pad batch to a multiple of 8, pick a tile <= tb_max that divides the
    padded batch exactly, and (on multi-TC chips) keep the number of grid
    steps a multiple of the core count for mid/large batches."""
    padded = _round_up(max(batch, 1), 8)
    steps = -(-padded // tb_max)
    if num_cores > 1 and padded > 64:
        steps = max(steps, num_cores)
        if steps % num_cores:
            steps += num_cores - steps % num_cores
    tb = _round_up(-(-padded // steps), 8)
    padded = tb * steps
    return padded, tb, steps


# ---------------------------------------------------------------------------
# Forward
# ---------------------------------------------------------------------------
@functools.partial(
    jax.jit,
    static_argnames=("action_size", "split_layer2", "tb_max", "num_cores"))
def causal_mlp_forward(observation, prev_action, prev_reward, fused, *,
                       action_size, split_layer2=False, tb_max=1024,
                       num_cores=1):
    # prev_action / prev_reward are accepted but unused, like the reference.
    del prev_action, prev_reward
    obs = observation.reshape(observation.shape[0], -1)   # keep native dtype;
    batch, in_size = obs.shape                            # bf16 cast is in-kernel
    n3 = fused["w3"].shape[1]                             # 128 (lane-dense out)

    # Batch padding + tiling (sublane-dense, no ragged output blocks).
    padded, tb, steps = _choose_tiling(batch, tb_max, num_cores)
    if padded != batch:
        obs = jnp.pad(obs, ((0, padded - batch), (0, 0)))

    const = lambda i: (0, 0)   # weights/biases: same block every grid step
    obs_spec = pl.BlockSpec((tb, in_size), lambda i: (i, 0))
    out_spec = pl.BlockSpec((tb, n3), lambda i: (i, 0))
    common = dict(
        out_shape=jax.ShapeDtypeStruct((padded, n3), jnp.float32),
        grid=(steps,),
        out_specs=out_spec,
        compiler_params=pltpu.CompilerParams(
            dimension_semantics=("parallel",),
            # Big batch tiles (tb up to 1024 rows, f32 obs double-buffered)
            # exceed v5e's 16 MiB scoped-VMEM default; 48 MiB is comfortably
            # under every generation's physical VMEM (64 MiB on v7x).
            vmem_limit_bytes=48 * 1024 * 1024,
        ),
    )

    if split_layer2:
        out = pl.pallas_call(
            _causal_mlp_kernel_split_l2,
            in_specs=[
                obs_spec,
                pl.BlockSpec(fused["w1"].shape, const),
                pl.BlockSpec(fused["b1"].shape, const),
                pl.BlockSpec(fused["w2p"].shape, const),
                pl.BlockSpec(fused["b2p"].shape, const),
                pl.BlockSpec(fused["w2v"].shape, const),
                pl.BlockSpec(fused["b2v"].shape, const),
                pl.BlockSpec(fused["w3"].shape, const),
                pl.BlockSpec(fused["b3"].shape, const),
            ],
            **common,
        )(obs, fused["w1"], fused["b1"], fused["w2p"], fused["b2p"],
          fused["w2v"], fused["b2v"], fused["w3"], fused["b3"])
    else:
        out = pl.pallas_call(
            _causal_mlp_kernel_fused,
            in_specs=[
                obs_spec,
                pl.BlockSpec(fused["w1"].shape, const),
                pl.BlockSpec(fused["b1"].shape, const),
                pl.BlockSpec(fused["w2"].shape, const),
                pl.BlockSpec(fused["b2"].shape, const),
                pl.BlockSpec(fused["w3"].shape, const),
                pl.BlockSpec(fused["b3"].shape, const),
            ],
            **common,
        )(obs, fused["w1"], fused["b1"], fused["w2"], fused["b2"],
          fused["w3"], fused["b3"])

    pi = out[:batch, :action_size]
    value = out[:batch, action_size]          # torch: .squeeze(-1)
    return pi, value


# ---------------------------------------------------------------------------
# References for correctness checking
# ---------------------------------------------------------------------------
def _mlp3_f32(x, w1, b1, w2, b2, w3, b3):
    h = jnp.maximum(x @ w1 + b1, 0.0)
    h = jnp.maximum(h @ w2 + b2, 0.0)
    return h @ w3 + b3


def reference_forward_f32(observation, params):
    obs = observation.reshape(observation.shape[0], -1).astype(jnp.float32)
    pi = _mlp3_f32(obs, params["w1p"], params["b1p"], params["w2p"],
                   params["b2p"], params["w3p"], params["b3p"])
    val = _mlp3_f32(obs, params["w1v"], params["b1v"], params["w2v"],
                    params["b2v"], params["w3v"], params["b3v"])
    return pi, val[:, 0]


def _mlp3_bf16(x, w1, b1, w2, b2, w3, b3):
    d = lambda a, b: jnp.dot(a.astype(jnp.bfloat16), b.astype(jnp.bfloat16),
                             preferred_element_type=jnp.float32)
    h = jnp.maximum(d(x, w1) + b1, 0.0)
    h = jnp.maximum(d(h, w2) + b2, 0.0)
    return d(h, w3) + b3


def reference_forward_bf16(observation, params):
    """Mirror of the kernel's bf16-matmul / f32-accumulate path, unfused."""
    obs = observation.reshape(observation.shape[0], -1)
    pi = _mlp3_bf16(obs, params["w1p"], params["b1p"], params["w2p"],
                    params["b2p"], params["w3p"], params["b3p"])
    val = _mlp3_bf16(obs, params["w1v"], params["b1v"], params["w2v"],
                     params["b2v"], params["w3v"], params["b3v"])
    return pi, val[:, 0]


# ---------------------------------------------------------------------------
if __name__ == "__main__":
    key = jax.random.PRNGKey(0)
    k_obs, k_act, k_rew, k_par = jax.random.split(key, 4)

    # observation_shape = (4, 16, 16), batch = 2, action_size = 8 -> in = 1024.
    batch = 2
    obs_shape = (4, 16, 16)
    action_size = 8
    input_size = int(obs_shape[0] * obs_shape[1] * obs_shape[2])

    observation = jax.random.normal(k_obs, (batch,) + obs_shape, jnp.float32)
    prev_action = jax.random.randint(k_act, (batch,), 0, action_size)
    prev_reward = jax.random.normal(k_rew, (batch,), jnp.float32)

    cfg = tpu_kernel_config()
    params = init_params(k_par, input_size, action_size)
    fused = fuse_params(params, action_size, split_layer2=cfg["split_layer2"])

    pi, value = causal_mlp_forward(
        observation, prev_action, prev_reward, fused,
        action_size=action_size, split_layer2=cfg["split_layer2"],
        tb_max=cfg["tb_max"], num_cores=cfg["num_cores"])
    jax.block_until_ready((pi, value))

    assert pi.shape == (batch, action_size), pi.shape
    assert value.shape == (batch,), value.shape

    # Tight check vs a reference that mirrors the bf16-matmul path (unfused).
    pi_b, val_b = reference_forward_bf16(observation, params)
    assert jnp.allclose(pi, pi_b, atol=1e-3, rtol=1e-3)
    assert jnp.allclose(value, val_b, atol=1e-3, rtol=1e-3)

    # Looser check vs the full-f32 reference (bf16 weight quantization).
    pi_f, val_f = reference_forward_f32(observation, params)
    assert jnp.allclose(pi, pi_f, atol=5e-2, rtol=5e-2)
    assert jnp.allclose(value, val_f, atol=5e-2, rtol=5e-2)

    # NOTE: at batch=2 this call is weight-DMA / launch bound on every TPU
    # generation; amortize by batching many env steps per call in the rollout.
    print("KERNEL_OK")
</pallas_src>

<mosaic_0001>
module attributes {stable_mosaic.version = 11 : i64} {
  func.func @_causal_mlp_kernel_fused(%arg0: i32, %arg1: memref<8x1024xf32, #tpu.memory_space<vmem>>, %arg2: memref<1024x512xbf16, #tpu.memory_space<vmem>>, %arg3: memref<1x512xf32, #tpu.memory_space<vmem>>, %arg4: memref<512x256xbf16, #tpu.memory_space<vmem>>, %arg5: memref<1x256xf32, #tpu.memory_space<vmem>>, %arg6: memref<256x128xbf16, #tpu.memory_space<vmem>>, %arg7: memref<1x128xf32, #tpu.memory_space<vmem>>, %arg8: memref<8x128xf32, #tpu.memory_space<vmem>>) attributes {dimension_semantics = [#tpu.dimension_semantics<parallel>], iteration_bounds = array<i64: 1>, scalar_prefetch = 0 : i64, scratch_operands = 0 : i64, tpu.core_type = #tpu.core_type<tc>, window_params = [{transform_indices = @transform_0, window_bounds = array<i64: 8, 1024>}, {pipeline_mode = #tpu.pipeline_mode<synchronous>, transform_indices = @transform_1, window_bounds = array<i64: 1024, 512>}, {pipeline_mode = #tpu.pipeline_mode<synchronous>, transform_indices = @transform_2, window_bounds = array<i64: 1, 512>}, {pipeline_mode = #tpu.pipeline_mode<synchronous>, transform_indices = @transform_3, window_bounds = array<i64: 512, 256>}, {pipeline_mode = #tpu.pipeline_mode<synchronous>, transform_indices = @transform_4, window_bounds = array<i64: 1, 256>}, {pipeline_mode = #tpu.pipeline_mode<synchronous>, transform_indices = @transform_5, window_bounds = array<i64: 256, 128>}, {pipeline_mode = #tpu.pipeline_mode<synchronous>, transform_indices = @transform_6, window_bounds = array<i64: 1, 128>}, {transform_indices = @transform_7, window_bounds = array<i64: 8, 128>}]} {
    %c0 = arith.constant 0 : index
    %c0_0 = arith.constant 0 : index
    %0 = vector.load %arg1[%c0, %c0_0] : memref<8x1024xf32, #tpu.memory_space<vmem>>, vector<8x1024xf32>
    %1 = arith.truncf %0 : vector<8x1024xf32> to vector<8x1024xbf16>
    %c0_1 = arith.constant 0 : index
    %c0_2 = arith.constant 0 : index
    %2 = vector.load %arg2[%c0_1, %c0_2] : memref<1024x512xbf16, #tpu.memory_space<vmem>>, vector<1024x512xbf16>
    %cst = arith.constant dense<0.000000e+00> : vector<8x512xf32>
    %3 = tpu.matmul %1, %2, %cst {dimension_numbers = #tpu.dot_dimension_numbers<[1], [0], [0], [1], [0, 0, 1, 1], [], []>} : vector<8x1024xbf16>, vector<1024x512xbf16>, vector<8x512xf32> -> vector<8x512xf32>
    %c0_3 = arith.constant 0 : index
    %c0_4 = arith.constant 0 : index
    %4 = vector.load %arg3[%c0_3, %c0_4] : memref<1x512xf32, #tpu.memory_space<vmem>>, vector<1x512xf32>
    %5 = vector.broadcast %4 : vector<1x512xf32> to vector<8x512xf32>
    %6 = arith.addf %3, %5 : vector<8x512xf32>
    %cst_5 = arith.constant 0.000000e+00 : f32
    %7 = vector.broadcast %cst_5 : f32 to vector<8x512xf32>
    %8 = arith.maximumf %6, %7 : vector<8x512xf32>
    %9 = arith.truncf %8 : vector<8x512xf32> to vector<8x512xbf16>
    %c0_6 = arith.constant 0 : index
    %c0_7 = arith.constant 0 : index
    %10 = vector.load %arg4[%c0_6, %c0_7] : memref<512x256xbf16, #tpu.memory_space<vmem>>, vector<512x256xbf16>
    %cst_8 = arith.constant dense<0.000000e+00> : vector<8x256xf32>
    %11 = tpu.matmul %9, %10, %cst_8 {dimension_numbers = #tpu.dot_dimension_numbers<[1], [0], [0], [1], [0, 0, 1, 1], [], []>} : vector<8x512xbf16>, vector<512x256xbf16>, vector<8x256xf32> -> vector<8x256xf32>
    %c0_9 = arith.constant 0 : index
    %c0_10 = arith.constant 0 : index
    %12 = vector.load %arg5[%c0_9, %c0_10] : memref<1x256xf32, #tpu.memory_space<vmem>>, vector<1x256xf32>
    %13 = vector.broadcast %12 : vector<1x256xf32> to vector<8x256xf32>
    %14 = arith.addf %11, %13 : vector<8x256xf32>
    %cst_11 = arith.constant 0.000000e+00 : f32
    %15 = vector.broadcast %cst_11 : f32 to vector<8x256xf32>
    %16 = arith.maximumf %14, %15 : vector<8x256xf32>
    %17 = arith.truncf %16 : vector<8x256xf32> to vector<8x256xbf16>
    %c0_12 = arith.constant 0 : index
    %c0_13 = arith.constant 0 : index
    %18 = vector.load %arg6[%c0_12, %c0_13] : memref<256x128xbf16, #tpu.memory_space<vmem>>, vector<256x128xbf16>
    %cst_14 = arith.constant dense<0.000000e+00> : vector<8x128xf32>
    %19 = tpu.matmul %17, %18, %cst_14 {dimension_numbers = #tpu.dot_dimension_numbers<[1], [0], [0], [1], [0, 0, 1, 1], [], []>} : vector<8x256xbf16>, vector<256x128xbf16>, vector<8x128xf32> -> vector<8x128xf32>
    %c0_15 = arith.constant 0 : index
    %c0_16 = arith.constant 0 : index
    %20 = vector.load %arg7[%c0_15, %c0_16] : memref<1x128xf32, #tpu.memory_space<vmem>>, vector<1x128xf32>
    %21 = vector.broadcast %20 : vector<1x128xf32> to vector<8x128xf32>
    %22 = arith.addf %19, %21 : vector<8x128xf32>
    %c0_17 = arith.constant 0 : index
    %c0_18 = arith.constant 0 : index
    %23 = vector.load %arg8[%c0_17, %c0_18] : memref<8x128xf32, #tpu.memory_space<vmem>>, vector<8x128xf32>
    tpu.vector_store %arg8[%c0_17, %c0_18], %22 {strides = array<i32>} : memref<8x128xf32, #tpu.memory_space<vmem>>, vector<8x128xf32>,
    return
  }
  func.func @transform_0(%arg0: i32) -> (i32, i32) {
    %c0_i32 = arith.constant 0 : i32
    %c0_i32_0 = arith.constant 0 : i32
    return %arg0, %c0_i32 : i32, i32
  }
  func.func @transform_1(%arg0: i32) -> (i32, i32) {
    %c0_i32 = arith.constant 0 : i32
    %c0_i32_0 = arith.constant 0 : i32
    %c0_i32_1 = arith.constant 0 : i32
    return %c0_i32, %c0_i32_0 : i32, i32
  }
  func.func @transform_2(%arg0: i32) -> (i32, i32) {
    %c0_i32 = arith.constant 0 : i32
    %c0_i32_0 = arith.constant 0 : i32
    %c0_i32_1 = arith.constant 0 : i32
    return %c0_i32, %c0_i32_0 : i32, i32
  }
  func.func @transform_3(%arg0: i32) -> (i32, i32) {
    %c0_i32 = arith.constant 0 : i32
    %c0_i32_0 = arith.constant 0 : i32
    %c0_i32_1 = arith.constant 0 : i32
    return %c0_i32, %c0_i32_0 : i32, i32
  }
  func.func @transform_4(%arg0: i32) -> (i32, i32) {
    %c0_i32 = arith.constant 0 : i32
    %c0_i32_0 = arith.constant 0 : i32
    %c0_i32_1 = arith.constant 0 : i32
    return %c0_i32, %c0_i32_0 : i32, i32
  }
  func.func @transform_5(%arg0: i32) -> (i32, i32) {
    %c0_i32 = arith.constant 0 : i32
    %c0_i32_0 = arith.constant 0 : i32
    %c0_i32_1 = arith.constant 0 : i32
    return %c0_i32, %c0_i32_0 : i32, i32
  }
  func.func @transform_6(%arg0: i32) -> (i32, i32) {
    %c0_i32 = arith.constant 0 : i32
    %c0_i32_0 = arith.constant 0 : i32
    %c0_i32_1 = arith.constant 0 : i32
    return %c0_i32, %c0_i32_0 : i32, i32
  }
  func.func @transform_7(%arg0: i32) -> (i32, i32) {
    %c0_i32 = arith.constant 0 : i32
    %c0_i32_0 = arith.constant 0 : i32
    return %arg0, %c0_i32 : i32, i32
  }
}

</mosaic_0001>

<llo_original>
// kernel: causal_mlp_forward.1
$region0: #{causal_mlp_forward.1}
  #allocation0 [shape = 'u32[]', space=smem, size = 0x4, offset = 0x4, fixed_abs, tag = 'smem constant byte address 0x4 - core index']
  #allocation1 [shape = 'u32[144,128]{1,0:T(1,128)}', space=vmem, size = 0x12000, scoped, tag = 'internal scratch']
  %s0 = inlined_call_operand.vmem [shape: f32[8,1024], index: 0, kind: input, shape index: {}]
  %s1 = inlined_call_operand.hbm [shape: bf16[1024,512], index: 1, kind: input, shape index: {}]
  %s2 = inlined_call_operand.vmem [shape: f32[1,512], index: 2, kind: input, shape index: {}]
  %s3 = inlined_call_operand.hbm [shape: bf16[512,256], index: 3, kind: input, shape index: {}]
  %s4 = inlined_call_operand.vmem [shape: f32[1,256], index: 4, kind: input, shape index: {}]
  %s5 = inlined_call_operand.vmem [shape: bf16[256,128], index: 5, kind: input, shape index: {}]
  %s6 = inlined_call_operand.vmem [shape: f32[1,128], index: 6, kind: input, shape index: {}]
  %s7 = inlined_call_operand.vmem [shape: f32[8,128], index: 7, kind: output, shape index: {}]
  %s8 = sld [smem:[#allocation0]]
  $region46: #{causal_mlp_forward.1} parent=0
    _
  %s10 = ssub.s32 1, %s8
  %s11 = scalar_select 0, %s10, %s8
  $region1: #{causal_mlp_forward.1} parent=0
    #allocation2 [shape = 'u8[1048576]{0}', space=vmem, size = 0x100000, scoped, tag = 'input window, operand 1, single buffered']
    #allocation3 [shape = 's32[1]{0}', space=sflag, size = 0x4, scoped, tag = 'scoped memory for causal_mlp_forward.1']
    #allocation4 [shape = 'u8[262144]{0}', space=vmem, size = 0x40000, scoped, tag = 'input window, operand 3, single buffered']
    #allocation5 [shape = 's32[1]{0}', space=sflag, size = 0x4, scoped, tag = 'scoped memory for causal_mlp_forward.1']
    %12 = vsyncpa [#allocation3], 0
    %13 = vsyncpa [#allocation5], 0
    // Predicated region
    $region2: #{causal_mlp_forward.1} parent=1 // pred_check
      _
    $region3: #{causal_mlp_forward.1} parent=1 // pred_check_branch
      %15 = sbr.rel (0) target = $region5
    $region4: #{causal_mlp_forward.1} parent=1 // pred_region
      _
    $region5: #{causal_mlp_forward.1} parent=1 // pred_fallthru
      _
    // Predicated region
    $region6: #{causal_mlp_forward.1} parent=1 // pred_check
      _
    $region7: #{causal_mlp_forward.1} parent=1 // pred_check_branch
      %17 = sbr.rel (0) target = $region9
    $region8: #{causal_mlp_forward.1} parent=1 // pred_region
      %s19 = ssub.s32 32768, 32768
      %20 = vsyncadd [#allocation3], %s19
      %s21 = sshll.u32 [#allocation2], 4
      %s22 = int_to_ptr.vmem [resolvable:$true] %s21
      %27 = dma.hbm_to_vmem [thread:$0]  %s1, 32768, %s22, [#allocation3], 256, 256, 16
    $region9: #{causal_mlp_forward.1} parent=1 // pred_fallthru
      _
    // Predicated region
    $region10: #{causal_mlp_forward.1} parent=1 // pred_check
      _
    $region11: #{causal_mlp_forward.1} parent=1 // pred_check_branch
      %29 = sbr.rel (0) target = $region13
    $region12: #{causal_mlp_forward.1} parent=1 // pred_region
      _
    $region13: #{causal_mlp_forward.1} parent=1 // pred_fallthru
      _
    // Predicated region
    $region14: #{causal_mlp_forward.1} parent=1 // pred_check
      _
    $region15: #{causal_mlp_forward.1} parent=1 // pred_check_branch
      %31 = sbr.rel (0) target = $region17
    $region16: #{causal_mlp_forward.1} parent=1 // pred_region
      %s33 = ssub.s32 8192, 8192
      %34 = vsyncadd [#allocation5], %s33
      %s35 = sshll.u32 [#allocation4], 4
      %s36 = int_to_ptr.vmem [resolvable:$true] %s35
      %41 = dma.hbm_to_vmem [thread:$0]  %s3, 8192, %s36, [#allocation5], 128, 128, 8
    $region17: #{causal_mlp_forward.1} parent=1 // pred_fallthru
      _
    // Predicated region
    $region18: #{causal_mlp_forward.1} parent=1 // pred_check
      _
    $region19: #{causal_mlp_forward.1} parent=1 // pred_check_branch
      %43 = sbr.rel (0) target = $region21
    $region20: #{causal_mlp_forward.1} parent=1 // pred_region
      _
    $region21: #{causal_mlp_forward.1} parent=1 // pred_fallthru
      _
    // Predicated region
    $region22: #{causal_mlp_forward.1} parent=1 // pred_check
      _
    $region23: #{causal_mlp_forward.1} parent=1 // pred_check_branch
      %45 = sbr.rel (0) target = $region25
    $region24: #{causal_mlp_forward.1} parent=1 // pred_region
      _
    $region25: #{causal_mlp_forward.1} parent=1 // pred_fallthru
      _
    // Predicated region
    $region26: #{causal_mlp_forward.1} parent=1 // pred_check
      _
    $region27: #{causal_mlp_forward.1} parent=1 // pred_check_branch
      %47 = sbr.rel (0) target = $region29
    $region28: #{causal_mlp_forward.1} parent=1 // pred_region
      _
    $region29: #{causal_mlp_forward.1} parent=1 // pred_fallthru
      _
    // Predicated region
    $region30: #{causal_mlp_forward.1} parent=1 // pred_check
      _
    $region31: #{causal_mlp_forward.1} parent=1 // pred_check_branch
      %49 = sbr.rel (0) target = $region33
    $region32: #{causal_mlp_forward.1} parent=1 // pred_region
      %50 = dma.done [#allocation3], 32768
    $region33: #{causal_mlp_forward.1} parent=1 // pred_fallthru
      _
    // Predicated region
    $region34: #{causal_mlp_forward.1} parent=1 // pred_check
      _
    $region35: #{causal_mlp_forward.1} parent=1 // pred_check_branch
      %52 = sbr.rel (0) target = $region37
    $region36: #{causal_mlp_forward.1} parent=1 // pred_region
      %53 = dma.done [#allocation5], 8192
    $region37: #{causal_mlp_forward.1} parent=1 // pred_fallthru
      _
    %v55 = vld [vmem:[%s0] sm:$0xff]
    %v56 = vld [vmem:[%s0 + $0x8] sm:$0xff]
    %v57 = vld [vmem:[%s0 + $0x10] sm:$0xff]
    %v58 = vld [vmem:[%s0 + $0x18] sm:$0xff]
    %v59 = vld [vmem:[%s0 + $0x20] sm:$0xff]
    %v60 = vld [vmem:[%s0 + $0x28] sm:$0xff]
    %v61 = vld [vmem:[%s0 + $0x30] sm:$0xff]
    %v62 = vld [vmem:[%s0 + $0x38] sm:$0xff]
    %v63 = vpack.c.bf16 %v55, %v55
    %v64 = vpack.c.bf16 %v56, %v56
    %v65 = vpack.c.bf16 %v57, %v57
    %v66 = vpack.c.bf16 %v58, %v58
    %v67 = vpack.c.bf16 %v59, %v59
    %v68 = vpack.c.bf16 %v60, %v60
    %v69 = vpack.c.bf16 %v61, %v61
    %v70 = vpack.c.bf16 %v62, %v62
    %v71 = vld [vmem:[#allocation2] sm:$0xff]
    %v72 = vld [vmem:[#allocation2 + $0x8] sm:$0xff]
    %v73 = vld [vmem:[#allocation2 + $0x10] sm:$0xff]
    %v74 = vld [vmem:[#allocation2 + $0x18] sm:$0xff]
    %v75 = vld [vmem:[#allocation2 + $0x20] sm:$0xff]
    %v76 = vld [vmem:[#allocation2 + $0x28] sm:$0xff]
    %v77 = vld [vmem:[#allocation2 + $0x30] sm:$0xff]
    %v78 = vld [vmem:[#allocation2 + $0x38] sm:$0xff]
    %v79 = vld [vmem:[#allocation2 + $0x40] sm:$0xff]
    %v80 = vld [vmem:[#allocation2 + $0x48] sm:$0xff]
    %v81 = vld [vmem:[#allocation2 + $0x50] sm:$0xff]
    %v82 = vld [vmem:[#allocation2 + $0x58] sm:$0xff]
    %v83 = vld [vmem:[#allocation2 + $0x60] sm:$0xff]
    %v84 = vld [vmem:[#allocation2 + $0x68] sm:$0xff]
    %v85 = vld [vmem:[#allocation2 + $0x70] sm:$0xff]
    %v86 = vld [vmem:[#allocation2 + $0x78] sm:$0xff]
    %v87 = vld [vmem:[#allocation2 + $0x80] sm:$0xff]
    %v88 = vld [vmem:[#allocation2 + $0x88] sm:$0xff]
    %v89 = vld [vmem:[#allocation2 + $0x90] sm:$0xff]
    %v90 = vld [vmem:[#allocation2 + $0x98] sm:$0xff]
    %v91 = vld [vmem:[#allocation2 + $0xa0] sm:$0xff]
    %v92 = vld [vmem:[#allocation2 + $0xa8] sm:$0xff]
    %v93 = vld [vmem:[#allocation2 + $0xb0] sm:$0xff]
    %v94 = vld [vmem:[#allocation2 + $0xb8] sm:$0xff]
    %v95 = vld [vmem:[#allocation2 + $0xc0] sm:$0xff]
    %v96 = vld [vmem:[#allocation2 + $0xc8] sm:$0xff]
    %v97 = vld [vmem:[#allocation2 + $0xd0] sm:$0xff]
    %v98 = vld [vmem:[#allocation2 + $0xd8] sm:$0xff]
    %v99 = vld [vmem:[#allocation2 + $0xe0] sm:$0xff]
    %v100 = vld [vmem:[#allocation2 + $0xe8] sm:$0xff]
    %v101 = vld [vmem:[#allocation2 + $0xf0] sm:$0xff]
    %v102 = vld [vmem:[#allocation2 + $0xf8] sm:$0xff]
    %v103 = vld [vmem:[#allocation2 + $0x100] sm:$0xff]
    %v104 = vld [vmem:[#allocation2 + $0x108] sm:$0xff]
    %v105 = vld [vmem:[#allocation2 + $0x110] sm:$0xff]
    %v106 = vld [vmem:[#allocation2 + $0x118] sm:$0xff]
    %v107 = vld [vmem:[#allocation2 + $0x120] sm:$0xff]
    %v108 = vld [vmem:[#allocation2 + $0x128] sm:$0xff]
    %v109 = vld [vmem:[#allocation2 + $0x130] sm:$0xff]
    %v110 = vld [vmem:[#allocation2 + $0x138] sm:$0xff]
    %v111 = vld [vmem:[#allocation2 + $0x140] sm:$0xff]
    %v112 = vld [vmem:[#allocation2 + $0x148] sm:$0xff]
    %v113 = vld [vmem:[#allocation2 + $0x150] sm:$0xff]
    %v114 = vld [vmem:[#allocation2 + $0x158] sm:$0xff]
    %v115 = vld [vmem:[#allocation2 + $0x160] sm:$0xff]
    %v116 = vld [vmem:[#allocation2 + $0x168] sm:$0xff]
    %v117 = vld [vmem:[#allocation2 + $0x170] sm:$0xff]
    %v118 = vld [vmem:[#allocation2 + $0x178] sm:$0xff]
    %v119 = vld [vmem:[#allocation2 + $0x180] sm:$0xff]
    %v120 = vld [vmem:[#allocation2 + $0x188] sm:$0xff]
    %v121 = vld [vmem:[#allocation2 + $0x190] sm:$0xff]
    %v122 = vld [vmem:[#allocation2 + $0x198] sm:$0xff]
    %v123 = vld [vmem:[#allocation2 + $0x1a0] sm:$0xff]
    %v124 = vld [vmem:[#allocation2 + $0x1a8] sm:$0xff]
    %v125 = vld [vmem:[#allocation2 + $0x1b0] sm:$0xff]
    %v126 = vld [vmem:[#allocation2 + $0x1b8] sm:$0xff]
    %v127 = vld [vmem:[#allocation2 + $0x1c0] sm:$0xff]
    %v128 = vld [vmem:[#allocation2 + $0x1c8] sm:$0xff]
    %v129 = vld [vmem:[#allocation2 + $0x1d0] sm:$0xff]
    %v130 = vld [vmem:[#allocation2 + $0x1d8] sm:$0xff]
    %v131 = vld [vmem:[#allocation2 + $0x1e0] sm:$0xff]
    %v132 = vld [vmem:[#allocation2 + $0x1e8] sm:$0xff]
    %v133 = vld [vmem:[#allocation2 + $0x1f0] sm:$0xff]
    %v134 = vld [vmem:[#allocation2 + $0x1f8] sm:$0xff]
    %v135 = vld [vmem:[#allocation2 + $0x200] sm:$0xff]
    %v136 = vld [vmem:[#allocation2 + $0x208] sm:$0xff]
    %v137 = vld [vmem:[#allocation2 + $0x210] sm:$0xff]
    %v138 = vld [vmem:[#allocation2 + $0x218] sm:$0xff]
    %v139 = vld [vmem:[#allocation2 + $0x220] sm:$0xff]
    %v140 = vld [vmem:[#allocation2 + $0x228] sm:$0xff]
    %v141 = vld [vmem:[#allocation2 + $0x230] sm:$0xff]
    %v142 = vld [vmem:[#allocation2 + $0x238] sm:$0xff]
    %v143 = vld [vmem:[#allocation2 + $0x240] sm:$0xff]
    %v144 = vld [vmem:[#allocation2 + $0x248] sm:$0xff]
    %v145 = vld [vmem:[#allocation2 + $0x250] sm:$0xff]
    %v146 = vld [vmem:[#allocation2 + $0x258] sm:$0xff]
    %v147 = vld [vmem:[#allocation2 + $0x260] sm:$0xff]
    %v148 = vld [vmem:[#allocation2 + $0x268] sm:$0xff]
    %v149 = vld [vmem:[#allocation2 + $0x270] sm:$0xff]
    %v150 = vld [vmem:[#allocation2 + $0x278] sm:$0xff]
    %v151 = vld [vmem:[#allocation2 + $0x280] sm:$0xff]
    %v152 = vld [vmem:[#allocation2 + $0x288] sm:$0xff]
    %v153 = vld [vmem:[#allocation2 + $0x290] sm:$0xff]
    %v154 = vld [vmem:[#allocation2 + $0x298] sm:$0xff]
    %v155 = vld [vmem:[#allocation2 + $0x2a0] sm:$0xff]
    %v156 = vld [vmem:[#allocation2 + $0x2a8] sm:$0xff]
    %v157 = vld [vmem:[#allocation2 + $0x2b0] sm:$0xff]
    %v158 = vld [vmem:[#allocation2 + $0x2b8] sm:$0xff]
    %v159 = vld [vmem:[#allocation2 + $0x2c0] sm:$0xff]
    %v160 = vld [vmem:[#allocation2 + $0x2c8] sm:$0xff]
    %v161 = vld [vmem:[#allocation2 + $0x2d0] sm:$0xff]
    %v162 = vld [vmem:[#allocation2 + $0x2d8] sm:$0xff]
    %v163 = vld [vmem:[#allocation2 + $0x2e0] sm:$0xff]
    %v164 = vld [vmem:[#allocation2 + $0x2e8] sm:$0xff]
    %v165 = vld [vmem:[#allocation2 + $0x2f0] sm:$0xff]
    %v166 = vld [vmem:[#allocation2 + $0x2f8] sm:$0xff]
    %v167 = vld [vmem:[#allocation2 + $0x300] sm:$0xff]
    %v168 = vld [vmem:[#allocation2 + $0x308] sm:$0xff]
    %v169 = vld [vmem:[#allocation2 + $0x310] sm:$0xff]
    %v170 = vld [vmem:[#allocation2 + $0x318] sm:$0xff]
    %v171 = vld [vmem:[#allocation2 + $0x320] sm:$0xff]
    %v172 = vld [vmem:[#allocation2 + $0x328] sm:$0xff]
    %v173 = vld [vmem:[#allocation2 + $0x330] sm:$0xff]
    %v174 = vld [vmem:[#allocation2 + $0x338] sm:$0xff]
    %v175 = vld [vmem:[#allocation2 + $0x340] sm:$0xff]
    %v176 = vld [vmem:[#allocation2 + $0x348] sm:$0xff]
    %v177 = vld [vmem:[#allocation2 + $0x350] sm:$0xff]
    %v178 = vld [vmem:[#allocation2 + $0x358] sm:$0xff]
    %v179 = vld [vmem:[#allocation2 + $0x360] sm:$0xff]
    %v180 = vld [vmem:[#allocation2 + $0x368] sm:$0xff]
    %v181 = vld [vmem:[#allocation2 + $0x370] sm:$0xff]
    %v182 = vld [vmem:[#allocation2 + $0x378] sm:$0xff]
    %v183 = vld [vmem:[#allocation2 + $0x380] sm:$0xff]
    %v184 = vld [vmem:[#allocation2 + $0x388] sm:$0xff]
    %v185 = vld [vmem:[#allocation2 + $0x390] sm:$0xff]
    %v186 = vld [vmem:[#allocation2 + $0x398] sm:$0xff]
    %v187 = vld [vmem:[#allocation2 + $0x3a0] sm:$0xff]
    %v188 = vld [vmem:[#allocation2 + $0x3a8] sm:$0xff]
    %v189 = vld [vmem:[#allocation2 + $0x3b0] sm:$0xff]
    %v190 = vld [vmem:[#allocation2 + $0x3b8] sm:$0xff]
    %v191 = vld [vmem:[#allocation2 + $0x3c0] sm:$0xff]
    %v192 = vld [vmem:[#allocation2 + $0x3c8] sm:$0xff]
    %v193 = vld [vmem:[#allocation2 + $0x3d0] sm:$0xff]
    %v194 = vld [vmem:[#allocation2 + $0x3d8] sm:$0xff]
    %v195 = vld [vmem:[#allocation2 + $0x3e0] sm:$0xff]
    %v196 = vld [vmem:[#allocation2 + $0x3e8] sm:$0xff]
    %v197 = vld [vmem:[#allocation2 + $0x3f0] sm:$0xff]
    %v198 = vld [vmem:[#allocation2 + $0x3f8] sm:$0xff]
    %v199 = vld [vmem:[#allocation2 + $0x400] sm:$0xff]
    %v200 = vld [vmem:[#allocation2 + $0x408] sm:$0xff]
    %v201 = vld [vmem:[#allocation2 + $0x410] sm:$0xff]
    %v202 = vld [vmem:[#allocation2 + $0x418] sm:$0xff]
    %v203 = vld [vmem:[#allocation2 + $0x420] sm:$0xff]
    %v204 = vld [vmem:[#allocation2 + $0x428] sm:$0xff]
    %v205 = vld [vmem:[#allocation2 + $0x430] sm:$0xff]
    %v206 = vld [vmem:[#allocation2 + $0x438] sm:$0xff]
    %v207 = vld [vmem:[#allocation2 + $0x440] sm:$0xff]
    %v208 = vld [vmem:[#allocation2 + $0x448] sm:$0xff]
    %v209 = vld [vmem:[#allocation2 + $0x450] sm:$0xff]
    %v210 = vld [vmem:[#allocation2 + $0x458] sm:$0xff]
    %v211 = vld [vmem:[#allocation2 + $0x460] sm:$0xff]
    %v212 = vld [vmem:[#allocation2 + $0x468] sm:$0xff]
    %v213 = vld [vmem:[#allocation2 + $0x470] sm:$0xff]
    %v214 = vld [vmem:[#allocation2 + $0x478] sm:$0xff]
    %v215 = vld [vmem:[#allocation2 + $0x480] sm:$0xff]
    %v216 = vld [vmem:[#allocation2 + $0x488] sm:$0xff]
    %v217 = vld [vmem:[#allocation2 + $0x490] sm:$0xff]
    %v218 = vld [vmem:[#allocation2 + $0x498] sm:$0xff]
    %v219 = vld [vmem:[#allocation2 + $0x4a0] sm:$0xff]
    %v220 = vld [vmem:[#allocation2 + $0x4a8] sm:$0xff]
    %v221 = vld [vmem:[#allocation2 + $0x4b0] sm:$0xff]
    %v222 = vld [vmem:[#allocation2 + $0x4b8] sm:$0xff]
    %v223 = vld [vmem:[#allocation2 + $0x4c0] sm:$0xff]
    %v224 = vld [vmem:[#allocation2 + $0x4c8] sm:$0xff]
    %v225 = vld [vmem:[#allocation2 + $0x4d0] sm:$0xff]
    %v226 = vld [vmem:[#allocation2 + $0x4d8] sm:$0xff]
    %v227 = vld [vmem:[#allocation2 + $0x4e0] sm:$0xff]
    %v228 = vld [vmem:[#allocation2 + $0x4e8] sm:$0xff]
    %v229 = vld [vmem:[#allocation2 + $0x4f0] sm:$0xff]
    %v230 = vld [vmem:[#allocation2 + $0x4f8] sm:$0xff]
    %v231 = vld [vmem:[#allocation2 + $0x500] sm:$0xff]
    %v232 = vld [vmem:[#allocation2 + $0x508] sm:$0xff]
    %v233 = vld [vmem:[#allocation2 + $0x510] sm:$0xff]
    %v234 = vld [vmem:[#allocation2 + $0x518] sm:$0xff]
    %v235 = vld [vmem:[#allocation2 + $0x520] sm:$0xff]
    %v236 = vld [vmem:[#allocation2 + $0x528] sm:$0xff]
    %v237 = vld [vmem:[#allocation2 + $0x530] sm:$0xff]
    %v238 = vld [vmem:[#allocation2 + $0x538] sm:$0xff]
    %v239 = vld [vmem:[#allocation2 + $0x540] sm:$0xff]
    %v240 = vld [vmem:[#allocation2 + $0x548] sm:$0xff]
    %v241 = vld [vmem:[#allocation2 + $0x550] sm:$0xff]
    %v242 = vld [vmem:[#allocation2 + $0x558] sm:$0xff]
    %v243 = vld [vmem:[#allocation2 + $0x560] sm:$0xff]
    %v244 = vld [vmem:[#allocation2 + $0x568] sm:$0xff]
    %v245 = vld [vmem:[#allocation2 + $0x570] sm:$0xff]
    %v246 = vld [vmem:[#allocation2 + $0x578] sm:$0xff]
    %v247 = vld [vmem:[#allocation2 + $0x580] sm:$0xff]
    %v248 = vld [vmem:[#allocation2 + $0x588] sm:$0xff]
    %v249 = vld [vmem:[#allocation2 + $0x590] sm:$0xff]
    %v250 = vld [vmem:[#allocation2 + $0x598] sm:$0xff]
    %v251 = vld [vmem:[#allocation2 + $0x5a0] sm:$0xff]
    %v252 = vld [vmem:[#allocation2 + $0x5a8] sm:$0xff]
    %v253 = vld [vmem:[#allocation2 + $0x5b0] sm:$0xff]
    %v254 = vld [vmem:[#allocation2 + $0x5b8] sm:$0xff]
    %v255 = vld [vmem:[#allocation2 + $0x5c0] sm:$0xff]
    %v256 = vld [vmem:[#allocation2 + $0x5c8] sm:$0xff]
    %v257 = vld [vmem:[#allocation2 + $0x5d0] sm:$0xff]
    %v258 = vld [vmem:[#allocation2 + $0x5d8] sm:$0xff]
    %v259 = vld [vmem:[#allocation2 + $0x5e0] sm:$0xff]
    %v260 = vld [vmem:[#allocation2 + $0x5e8] sm:$0xff]
    %v261 = vld [vmem:[#allocation2 + $0x5f0] sm:$0xff]
    %v262 = vld [vmem:[#allocation2 + $0x5f8] sm:$0xff]
    %v263 = vld [vmem:[#allocation2 + $0x600] sm:$0xff]
    %v264 = vld [vmem:[#allocation2 + $0x608] sm:$0xff]
    %v265 = vld [vmem:[#allocation2 + $0x610] sm:$0xff]
    %v266 = vld [vmem:[#allocation2 + $0x618] sm:$0xff]
    %v267 = vld [vmem:[#allocation2 + $0x620] sm:$0xff]
    %v268 = vld [vmem:[#allocation2 + $0x628] sm:$0xff]
    %v269 = vld [vmem:[#allocation2 + $0x630] sm:$0xff]
    %v270 = vld [vmem:[#allocation2 + $0x638] sm:$0xff]
    %v271 = vld [vmem:[#allocation2 + $0x640] sm:$0xff]
    %v272 = vld [vmem:[#allocation2 + $0x648] sm:$0xff]
    %v273 = vld [vmem:[#allocation2 + $0x650] sm:$0xff]
    %v274 = vld [vmem:[#allocation2 + $0x658] sm:$0xff]
    %v275 = vld [vmem:[#allocation2 + $0x660] sm:$0xff]
    %v276 = vld [vmem:[#allocation2 + $0x668] sm:$0xff]
    %v277 = vld [vmem:[#allocation2 + $0x670] sm:$0xff]
    %v278 = vld [vmem:[#allocation2 + $0x678] sm:$0xff]
    %v279 = vld [vmem:[#allocation2 + $0x680] sm:$0xff]
    %v280 = vld [vmem:[#allocation2 + $0x688] sm:$0xff]
    %v281 = vld [vmem:[#allocation2 + $0x690] sm:$0xff]
    %v282 = vld [vmem:[#allocation2 + $0x698] sm:$0xff]
    %v283 = vld [vmem:[#allocation2 + $0x6a0] sm:$0xff]
    %v284 = vld [vmem:[#allocation2 + $0x6a8] sm:$0xff]
    %v285 = vld [vmem:[#allocation2 + $0x6b0] sm:$0xff]
    %v286 = vld [vmem:[#allocation2 + $0x6b8] sm:$0xff]
    %v287 = vld [vmem:[#allocation2 + $0x6c0] sm:$0xff]
    %v288 = vld [vmem:[#allocation2 + $0x6c8] sm:$0xff]
    %v289 = vld [vmem:[#allocation2 + $0x6d0] sm:$0xff]
    %v290 = vld [vmem:[#allocation2 + $0x6d8] sm:$0xff]
    %v291 = vld [vmem:[#allocation2 + $0x6e0] sm:$0xff]
    %v292 = vld [vmem:[#allocation2 + $0x6e8] sm:$0xff]
    %v293 = vld [vmem:[#allocation2 + $0x6f0] sm:$0xff]
    %v294 = vld [vmem:[#allocation2 + $0x6f8] sm:$0xff]
    %v295 = vld [vmem:[#allocation2 + $0x700] sm:$0xff]
    %v296 = vld [vmem:[#allocation2 + $0x708] sm:$0xff]
    %v297 = vld [vmem:[#allocation2 + $0x710] sm:$0xff]
    %v298 = vld [vmem:[#allocation2 + $0x718] sm:$0xff]
    %v299 = vld [vmem:[#allocation2 + $0x720] sm:$0xff]
    %v300 = vld [vmem:[#allocation2 + $0x728] sm:$0xff]
    %v301 = vld [vmem:[#allocation2 + $0x730] sm:$0xff]
    %v302 = vld [vmem:[#allocation2 + $0x738] sm:$0xff]
    %v303 = vld [vmem:[#allocation2 + $0x740] sm:$0xff]
    %v304 = vld [vmem:[#allocation2 + $0x748] sm:$0xff]
    %v305 = vld [vmem:[#allocation2 + $0x750] sm:$0xff]
    %v306 = vld [vmem:[#allocation2 + $0x758] sm:$0xff]
    %v307 = vld [vmem:[#allocation2 + $0x760] sm:$0xff]
    %v308 = vld [vmem:[#allocation2 + $0x768] sm:$0xff]
    %v309 = vld [vmem:[#allocation2 + $0x770] sm:$0xff]
    %v310 = vld [vmem:[#allocation2 + $0x778] sm:$0xff]
    %v311 = vld [vmem:[#allocation2 + $0x780] sm:$0xff]
    %v312 = vld [vmem:[#allocation2 + $0x788] sm:$0xff]
    %v313 = vld [vmem:[#allocation2 + $0x790] sm:$0xff]
    %v314 = vld [vmem:[#allocation2 + $0x798] sm:$0xff]
    %v315 = vld [vmem:[#allocation2 + $0x7a0] sm:$0xff]
    %v316 = vld [vmem:[#allocation2 + $0x7a8] sm:$0xff]
    %v317 = vld [vmem:[#allocation2 + $0x7b0] sm:$0xff]
    %v318 = vld [vmem:[#allocation2 + $0x7b8] sm:$0xff]
    %v319 = vld [vmem:[#allocation2 + $0x7c0] sm:$0xff]
    %v320 = vld [vmem:[#allocation2 + $0x7c8] sm:$0xff]
    %v321 = vld [vmem:[#allocation2 + $0x7d0] sm:$0xff]
    %v322 = vld [vmem:[#allocation2 + $0x7d8] sm:$0xff]
    %v323 = vld [vmem:[#allocation2 + $0x7e0] sm:$0xff]
    %v324 = vld [vmem:[#allocation2 + $0x7e8] sm:$0xff]
    %v325 = vld [vmem:[#allocation2 + $0x7f0] sm:$0xff]
    %v326 = vld [vmem:[#allocation2 + $0x7f8] sm:$0xff]
    %v327 = vld [vmem:[%s2] sm:$0xf]
    %v329 = vlaneseq
    %v330 = vshrl.u32 %v329, 7
    %v331 = vsub.s32 0, %v330
    %v332 = vrot.slane %v327, %v331
    %v333 = vlaneseq
    %v334 = vshrl.u32 %v333, 7
    %v335 = vsub.s32 1, %v334
    %v336 = vrot.slane %v327, %v335
    %v337 = vlaneseq
    %v338 = vshrl.u32 %v337, 7
    %v339 = vsub.s32 2, %v338
    %v340 = vrot.slane %v327, %v339
    %v341 = vlaneseq
    %v342 = vshrl.u32 %v341, 7
    %v343 = vsub.s32 3, %v342
    %v344 = vrot.slane %v327, %v343
    %v605 = vunpack.c.l.b16 %v71
    %v606 = vunpack.c.h.b16 %v71
    %v607 = vunpack.c.l.b16 %v72
    %v608 = vunpack.c.h.b16 %v72
    %v609 = vunpack.c.l.b16 %v73
    %v610 = vunpack.c.h.b16 %v73
    %v611 = vunpack.c.l.b16 %v74
    %v612 = vunpack.c.h.b16 %v74
    %v613 = vunpack.c.l.b16 %v75
    %v614 = vunpack.c.h.b16 %v75
    %v615 = vunpack.c.l.b16 %v76
    %v616 = vunpack.c.h.b16 %v76
    %v617 = vunpack.c.l.b16 %v77
    %v618 = vunpack.c.h.b16 %v77
    %v619 = vunpack.c.l.b16 %v78
    %v620 = vunpack.c.h.b16 %v78
    %v621 = vunpack.c.l.b16 %v79
    %v622 = vunpack.c.h.b16 %v79
    %v623 = vunpack.c.l.b16 %v80
    %v624 = vunpack.c.h.b16 %v80
    %v625 = vunpack.c.l.b16 %v81
    %v626 = vunpack.c.h.b16 %v81
    %v627 = vunpack.c.l.b16 %v82
    %v628 = vunpack.c.h.b16 %v82
    %v629 = vunpack.c.l.b16 %v83
    %v630 = vunpack.c.h.b16 %v83
    %v631 = vunpack.c.l.b16 %v84
    %v632 = vunpack.c.h.b16 %v84
    %v633 = vunpack.c.l.b16 %v85
    %v634 = vunpack.c.h.b16 %v85
    %v635 = vunpack.c.l.b16 %v86
    %v636 = vunpack.c.h.b16 %v86
    %v637 = vunpack.c.l.b16 %v87
    %v638 = vunpack.c.h.b16 %v87
    %v639 = vunpack.c.l.b16 %v88
    %v640 = vunpack.c.h.b16 %v88
    %v641 = vunpack.c.l.b16 %v89
    %v642 = vunpack.c.h.b16 %v89
    %v643 = vunpack.c.l.b16 %v90
    %v644 = vunpack.c.h.b16 %v90
    %v645 = vunpack.c.l.b16 %v91
    %v646 = vunpack.c.h.b16 %v91
    %v647 = vunpack.c.l.b16 %v92
    %v648 = vunpack.c.h.b16 %v92
    %v649 = vunpack.c.l.b16 %v93
    %v650 = vunpack.c.h.b16 %v93
    %v651 = vunpack.c.l.b16 %v94
    %v652 = vunpack.c.h.b16 %v94
    %v653 = vunpack.c.l.b16 %v95
    %v654 = vunpack.c.h.b16 %v95
    %v655 = vunpack.c.l.b16 %v96
    %v656 = vunpack.c.h.b16 %v96
    %v657 = vunpack.c.l.b16 %v97
    %v658 = vunpack.c.h.b16 %v97
    %v659 = vunpack.c.l.b16 %v98
    %v660 = vunpack.c.h.b16 %v98
    %v661 = vunpack.c.l.b16 %v99
    %v662 = vunpack.c.h.b16 %v99
    %v663 = vunpack.c.l.b16 %v100
    %v664 = vunpack.c.h.b16 %v100
    %v665 = vunpack.c.l.b16 %v101
    %v666 = vunpack.c.h.b16 %v101
    %v667 = vunpack.c.l.b16 %v102
    %v668 = vunpack.c.h.b16 %v102
    %v669 = vunpack.c.l.b16 %v103
    %v670 = vunpack.c.h.b16 %v103
    %v671 = vunpack.c.l.b16 %v104
    %v672 = vunpack.c.h.b16 %v104
    %v673 = vunpack.c.l.b16 %v105
    %v674 = vunpack.c.h.b16 %v105
    %v675 = vunpack.c.l.b16 %v106
    %v676 = vunpack.c.h.b16 %v106
    %v677 = vunpack.c.l.b16 %v107
    %v678 = vunpack.c.h.b16 %v107
    %v679 = vunpack.c.l.b16 %v108
    %v680 = vunpack.c.h.b16 %v108
    %v681 = vunpack.c.l.b16 %v109
    %v682 = vunpack.c.h.b16 %v109
    %v683 = vunpack.c.l.b16 %v110
    %v684 = vunpack.c.h.b16 %v110
    %v685 = vunpack.c.l.b16 %v111
    %v686 = vunpack.c.h.b16 %v111
    %v687 = vunpack.c.l.b16 %v112
    %v688 = vunpack.c.h.b16 %v112
    %v689 = vunpack.c.l.b16 %v113
    %v690 = vunpack.c.h.b16 %v113
    %v691 = vunpack.c.l.b16 %v114
    %v692 = vunpack.c.h.b16 %v114
    %v693 = vunpack.c.l.b16 %v115
    %v694 = vunpack.c.h.b16 %v115
    %v695 = vunpack.c.l.b16 %v116
    %v696 = vunpack.c.h.b16 %v116
    %v697 = vunpack.c.l.b16 %v117
    %v698 = vunpack.c.h.b16 %v117
    %v699 = vunpack.c.l.b16 %v118
    %v700 = vunpack.c.h.b16 %v118
    %v701 = vunpack.c.l.b16 %v119
    %v702 = vunpack.c.h.b16 %v119
    %v703 = vunpack.c.l.b16 %v120
    %v704 = vunpack.c.h.b16 %v120
    %v705 = vunpack.c.l.b16 %v121
    %v706 = vunpack.c.h.b16 %v121
    %v707 = vunpack.c.l.b16 %v122
    %v708 = vunpack.c.h.b16 %v122
    %v709 = vunpack.c.l.b16 %v123
    %v710 = vunpack.c.h.b16 %v123
    %v711 = vunpack.c.l.b16 %v124
    %v712 = vunpack.c.h.b16 %v124
    %v713 = vunpack.c.l.b16 %v125
    %v714 = vunpack.c.h.b16 %v125
    %v715 = vunpack.c.l.b16 %v126
    %v716 = vunpack.c.h.b16 %v126
    %v717 = vunpack.c.l.b16 %v127
    %v718 = vunpack.c.h.b16 %v127
    %v719 = vunpack.c.l.b16 %v128
    %v720 = vunpack.c.h.b16 %v128
    %v721 = vunpack.c.l.b16 %v129
    %v722 = vunpack.c.h.b16 %v129
    %v723 = vunpack.c.l.b16 %v130
    %v724 = vunpack.c.h.b16 %v130
    %v725 = vunpack.c.l.b16 %v131
    %v726 = vunpack.c.h.b16 %v131
    %v727 = vunpack.c.l.b16 %v132
    %v728 = vunpack.c.h.b16 %v132
    %v729 = vunpack.c.l.b16 %v133
    %v730 = vunpack.c.h.b16 %v133
    %v731 = vunpack.c.l.b16 %v134
    %v732 = vunpack.c.h.b16 %v134
    %v733 = vunpack.c.l.b16 %v135
    %v734 = vunpack.c.h.b16 %v135
    %v735 = vunpack.c.l.b16 %v136
    %v736 = vunpack.c.h.b16 %v136
    %v737 = vunpack.c.l.b16 %v137
    %v738 = vunpack.c.h.b16 %v137
    %v739 = vunpack.c.l.b16 %v138
    %v740 = vunpack.c.h.b16 %v138
    %v741 = vunpack.c.l.b16 %v139
    %v742 = vunpack.c.h.b16 %v139
    %v743 = vunpack.c.l.b16 %v140
    %v744 = vunpack.c.h.b16 %v140
    %v745 = vunpack.c.l.b16 %v141
    %v746 = vunpack.c.h.b16 %v141
    %v747 = vunpack.c.l.b16 %v142
    %v748 = vunpack.c.h.b16 %v142
    %v749 = vunpack.c.l.b16 %v143
    %v750 = vunpack.c.h.b16 %v143
    %v751 = vunpack.c.l.b16 %v144
    %v752 = vunpack.c.h.b16 %v144
    %v753 = vunpack.c.l.b16 %v145
    %v754 = vunpack.c.h.b16 %v145
    %v755 = vunpack.c.l.b16 %v146
    %v756 = vunpack.c.h.b16 %v146
    %v757 = vunpack.c.l.b16 %v147
    %v758 = vunpack.c.h.b16 %v147
    %v759 = vunpack.c.l.b16 %v148
    %v760 = vunpack.c.h.b16 %v148
    %v761 = vunpack.c.l.b16 %v149
    %v762 = vunpack.c.h.b16 %v149
    %v763 = vunpack.c.l.b16 %v150
    %v764 = vunpack.c.h.b16 %v150
    %v765 = vunpack.c.l.b16 %v151
    %v766 = vunpack.c.h.b16 %v151
    %v767 = vunpack.c.l.b16 %v152
    %v768 = vunpack.c.h.b16 %v152
    %v769 = vunpack.c.l.b16 %v153
    %v770 = vunpack.c.h.b16 %v153
    %v771 = vunpack.c.l.b16 %v154
    %v772 = vunpack.c.h.b16 %v154
    %v773 = vunpack.c.l.b16 %v155
    %v774 = vunpack.c.h.b16 %v155
    %v775 = vunpack.c.l.b16 %v156
    %v776 = vunpack.c.h.b16 %v156
    %v777 = vunpack.c.l.b16 %v157
    %v778 = vunpack.c.h.b16 %v157
    %v779 = vunpack.c.l.b16 %v158
    %v780 = vunpack.c.h.b16 %v158
    %v781 = vunpack.c.l.b16 %v159
    %v782 = vunpack.c.h.b16 %v159
    %v783 = vunpack.c.l.b16 %v160
    %v784 = vunpack.c.h.b16 %v160
    %v785 = vunpack.c.l.b16 %v161
    %v786 = vunpack.c.h.b16 %v161
    %v787 = vunpack.c.l.b16 %v162
    %v788 = vunpack.c.h.b16 %v162
    %v789 = vunpack.c.l.b16 %v163
    %v790 = vunpack.c.h.b16 %v163
    %v791 = vunpack.c.l.b16 %v164
    %v792 = vunpack.c.h.b16 %v164
    %v793 = vunpack.c.l.b16 %v165
    %v794 = vunpack.c.h.b16 %v165
    %v795 = vunpack.c.l.b16 %v166
    %v796 = vunpack.c.h.b16 %v166
    %v797 = vunpack.c.l.b16 %v167
    %v798 = vunpack.c.h.b16 %v167
    %v799 = vunpack.c.l.b16 %v168
    %v800 = vunpack.c.h.b16 %v168
    %v801 = vunpack.c.l.b16 %v169
    %v802 = vunpack.c.h.b16 %v169
    %v803 = vunpack.c.l.b16 %v170
    %v804 = vunpack.c.h.b16 %v170
    %v805 = vunpack.c.l.b16 %v171
    %v806 = vunpack.c.h.b16 %v171
    %v807 = vunpack.c.l.b16 %v172
    %v808 = vunpack.c.h.b16 %v172
    %v809 = vunpack.c.l.b16 %v173
    %v810 = vunpack.c.h.b16 %v173
    %v811 = vunpack.c.l.b16 %v174
    %v812 = vunpack.c.h.b16 %v174
    %v813 = vunpack.c.l.b16 %v175
    %v814 = vunpack.c.h.b16 %v175
    %v815 = vunpack.c.l.b16 %v176
    %v816 = vunpack.c.h.b16 %v176
    %v817 = vunpack.c.l.b16 %v177
    %v818 = vunpack.c.h.b16 %v177
    %v819 = vunpack.c.l.b16 %v178
    %v820 = vunpack.c.h.b16 %v178
    %v821 = vunpack.c.l.b16 %v179
    %v822 = vunpack.c.h.b16 %v179
    %v823 = vunpack.c.l.b16 %v180
    %v824 = vunpack.c.h.b16 %v180
    %v825 = vunpack.c.l.b16 %v181
    %v826 = vunpack.c.h.b16 %v181
    %v827 = vunpack.c.l.b16 %v182
    %v828 = vunpack.c.h.b16 %v182
    %v829 = vunpack.c.l.b16 %v183
    %v830 = vunpack.c.h.b16 %v183
    %v831 = vunpack.c.l.b16 %v184
    %v832 = vunpack.c.h.b16 %v184
    %v833 = vunpack.c.l.b16 %v185
    %v834 = vunpack.c.h.b16 %v185
    %v835 = vunpack.c.l.b16 %v186
    %v836 = vunpack.c.h.b16 %v186
    %v837 = vunpack.c.l.b16 %v187
    %v838 = vunpack.c.h.b16 %v187
    %v839 = vunpack.c.l.b16 %v188
    %v840 = vunpack.c.h.b16 %v188
    %v841 = vunpack.c.l.b16 %v189
    %v842 = vunpack.c.h.b16 %v189
    %v843 = vunpack.c.l.b16 %v190
    %v844 = vunpack.c.h.b16 %v190
    %v845 = vunpack.c.l.b16 %v191
    %v846 = vunpack.c.h.b16 %v191
    %v847 = vunpack.c.l.b16 %v192
    %v848 = vunpack.c.h.b16 %v192
    %v849 = vunpack.c.l.b16 %v193
    %v850 = vunpack.c.h.b16 %v193
    %v851 = vunpack.c.l.b16 %v194
    %v852 = vunpack.c.h.b16 %v194
    %v853 = vunpack.c.l.b16 %v195
    %v854 = vunpack.c.h.b16 %v195
    %v855 = vunpack.c.l.b16 %v196
    %v856 = vunpack.c.h.b16 %v196
    %v857 = vunpack.c.l.b16 %v197
    %v858 = vunpack.c.h.b16 %v197
    %v859 = vunpack.c.l.b16 %v198
    %v860 = vunpack.c.h.b16 %v198
    %v861 = vunpack.c.l.b16 %v199
    %v862 = vunpack.c.h.b16 %v199
    %v863 = vunpack.c.l.b16 %v200
    %v864 = vunpack.c.h.b16 %v200
    %v865 = vunpack.c.l.b16 %v201
    %v866 = vunpack.c.h.b16 %v201
    %v867 = vunpack.c.l.b16 %v202
    %v868 = vunpack.c.h.b16 %v202
    %v869 = vunpack.c.l.b16 %v203
    %v870 = vunpack.c.h.b16 %v203
    %v871 = vunpack.c.l.b16 %v204
    %v872 = vunpack.c.h.b16 %v204
    %v873 = vunpack.c.l.b16 %v205
    %v874 = vunpack.c.h.b16 %v205
    %v875 = vunpack.c.l.b16 %v206
    %v876 = vunpack.c.h.b16 %v206
    %v877 = vunpack.c.l.b16 %v207
    %v878 = vunpack.c.h.b16 %v207
    %v879 = vunpack.c.l.b16 %v208
    %v880 = vunpack.c.h.b16 %v208
    %v881 = vunpack.c.l.b16 %v209
    %v882 = vunpack.c.h.b16 %v209
    %v883 = vunpack.c.l.b16 %v210
    %v884 = vunpack.c.h.b16 %v210
    %v885 = vunpack.c.l.b16 %v211
    %v886 = vunpack.c.h.b16 %v211
    %v887 = vunpack.c.l.b16 %v212
    %v888 = vunpack.c.h.b16 %v212
    %v889 = vunpack.c.l.b16 %v213
    %v890 = vunpack.c.h.b16 %v213
    %v891 = vunpack.c.l.b16 %v214
    %v892 = vunpack.c.h.b16 %v214
    %v893 = vunpack.c.l.b16 %v215
    %v894 = vunpack.c.h.b16 %v215
    %v895 = vunpack.c.l.b16 %v216
    %v896 = vunpack.c.h.b16 %v216
    %v897 = vunpack.c.l.b16 %v217
    %v898 = vunpack.c.h.b16 %v217
    %v899 = vunpack.c.l.b16 %v218
    %v900 = vunpack.c.h.b16 %v218
    %v901 = vunpack.c.l.b16 %v219
    %v902 = vunpack.c.h.b16 %v219
    %v903 = vunpack.c.l.b16 %v220
    %v904 = vunpack.c.h.b16 %v220
    %v905 = vunpack.c.l.b16 %v221
    %v906 = vunpack.c.h.b16 %v221
    %v907 = vunpack.c.l.b16 %v222
    %v908 = vunpack.c.h.b16 %v222
    %v909 = vunpack.c.l.b16 %v223
    %v910 = vunpack.c.h.b16 %v223
    %v911 = vunpack.c.l.b16 %v224
    %v912 = vunpack.c.h.b16 %v224
    %v913 = vunpack.c.l.b16 %v225
    %v914 = vunpack.c.h.b16 %v225
    %v915 = vunpack.c.l.b16 %v226
    %v916 = vunpack.c.h.b16 %v226
    %v917 = vunpack.c.l.b16 %v227
    %v918 = vunpack.c.h.b16 %v227
    %v919 = vunpack.c.l.b16 %v228
    %v920 = vunpack.c.h.b16 %v228
    %v921 = vunpack.c.l.b16 %v229
    %v922 = vunpack.c.h.b16 %v229
    %v923 = vunpack.c.l.b16 %v230
    %v924 = vunpack.c.h.b16 %v230
    %v925 = vunpack.c.l.b16 %v231
    %v926 = vunpack.c.h.b16 %v231
    %v927 = vunpack.c.l.b16 %v232
    %v928 = vunpack.c.h.b16 %v232
    %v929 = vunpack.c.l.b16 %v233
    %v930 = vunpack.c.h.b16 %v233
    %v931 = vunpack.c.l.b16 %v234
    %v932 = vunpack.c.h.b16 %v234
    %v933 = vunpack.c.l.b16 %v235
    %v934 = vunpack.c.h.b16 %v235
    %v935 = vunpack.c.l.b16 %v236
    %v936 = vunpack.c.h.b16 %v236
    %v937 = vunpack.c.l.b16 %v237
    %v938 = vunpack.c.h.b16 %v237
    %v939 = vunpack.c.l.b16 %v238
    %v940 = vunpack.c.h.b16 %v238
    %v941 = vunpack.c.l.b16 %v239
    %v942 = vunpack.c.h.b16 %v239
    %v943 = vunpack.c.l.b16 %v240
    %v944 = vunpack.c.h.b16 %v240
    %v945 = vunpack.c.l.b16 %v241
    %v946 = vunpack.c.h.b16 %v241
    %v947 = vunpack.c.l.b16 %v242
    %v948 = vunpack.c.h.b16 %v242
    %v949 = vunpack.c.l.b16 %v243
    %v950 = vunpack.c.h.b16 %v243
    %v951 = vunpack.c.l.b16 %v244
    %v952 = vunpack.c.h.b16 %v244
    %v953 = vunpack.c.l.b16 %v245
    %v954 = vunpack.c.h.b16 %v245
    %v955 = vunpack.c.l.b16 %v246
    %v956 = vunpack.c.h.b16 %v246
    %v957 = vunpack.c.l.b16 %v247
    %v958 = vunpack.c.h.b16 %v247
    %v959 = vunpack.c.l.b16 %v248
    %v960 = vunpack.c.h.b16 %v248
    %v961 = vunpack.c.l.b16 %v249
    %v962 = vunpack.c.h.b16 %v249
    %v963 = vunpack.c.l.b16 %v250
    %v964 = vunpack.c.h.b16 %v250
    %v965 = vunpack.c.l.b16 %v251
    %v966 = vunpack.c.h.b16 %v251
    %v967 = vunpack.c.l.b16 %v252
    %v968 = vunpack.c.h.b16 %v252
    %v969 = vunpack.c.l.b16 %v253
    %v970 = vunpack.c.h.b16 %v253
    %v971 = vunpack.c.l.b16 %v254
    %v972 = vunpack.c.h.b16 %v254
    %v973 = vunpack.c.l.b16 %v255
    %v974 = vunpack.c.h.b16 %v255
    %v975 = vunpack.c.l.b16 %v256
    %v976 = vunpack.c.h.b16 %v256
    %v977 = vunpack.c.l.b16 %v257
    %v978 = vunpack.c.h.b16 %v257
    %v979 = vunpack.c.l.b16 %v258
    %v980 = vunpack.c.h.b16 %v258
    %v981 = vunpack.c.l.b16 %v259
    %v982 = vunpack.c.h.b16 %v259
    %v983 = vunpack.c.l.b16 %v260
    %v984 = vunpack.c.h.b16 %v260
    %v985 = vunpack.c.l.b16 %v261
    %v986 = vunpack.c.h.b16 %v261
    %v987 = vunpack.c.l.b16 %v262
    %v988 = vunpack.c.h.b16 %v262
    %v989 = vunpack.c.l.b16 %v263
    %v990 = vunpack.c.h.b16 %v263
    %v991 = vunpack.c.l.b16 %v264
    %v992 = vunpack.c.h.b16 %v264
    %v993 = vunpack.c.l.b16 %v265
    %v994 = vunpack.c.h.b16 %v265
    %v995 = vunpack.c.l.b16 %v266
    %v996 = vunpack.c.h.b16 %v266
    %v997 = vunpack.c.l.b16 %v267
    %v998 = vunpack.c.h.b16 %v267
    %v999 = vunpack.c.l.b16 %v268
    %v1000 = vunpack.c.h.b16 %v268
    %v1001 = vunpack.c.l.b16 %v269
    %v1002 = vunpack.c.h.b16 %v269
    %v1003 = vunpack.c.l.b16 %v270
    %v1004 = vunpack.c.h.b16 %v270
    %v1005 = vunpack.c.l.b16 %v271
    %v1006 = vunpack.c.h.b16 %v271
    %v1007 = vunpack.c.l.b16 %v272
    %v1008 = vunpack.c.h.b16 %v272
    %v1009 = vunpack.c.l.b16 %v273
    %v1010 = vunpack.c.h.b16 %v273
    %v1011 = vunpack.c.l.b16 %v274
    %v1012 = vunpack.c.h.b16 %v274
    %v1013 = vunpack.c.l.b16 %v275
    %v1014 = vunpack.c.h.b16 %v275
    %v1015 = vunpack.c.l.b16 %v276
    %v1016 = vunpack.c.h.b16 %v276
    %v1017 = vunpack.c.l.b16 %v277
    %v1018 = vunpack.c.h.b16 %v277
    %v1019 = vunpack.c.l.b16 %v278
    %v1020 = vunpack.c.h.b16 %v278
    %v1021 = vunpack.c.l.b16 %v279
    %v1022 = vunpack.c.h.b16 %v279
    %v1023 = vunpack.c.l.b16 %v280
    %v1024 = vunpack.c.h.b16 %v280
    %v1025 = vunpack.c.l.b16 %v281
    %v1026 = vunpack.c.h.b16 %v281
    %v1027 = vunpack.c.l.b16 %v282
    %v1028 = vunpack.c.h.b16 %v282
    %v1029 = vunpack.c.l.b16 %v283
    %v1030 = vunpack.c.h.b16 %v283
    %v1031 = vunpack.c.l.b16 %v284
    %v1032 = vunpack.c.h.b16 %v284
    %v1033 = vunpack.c.l.b16 %v285
    %v1034 = vunpack.c.h.b16 %v285
    %v1035 = vunpack.c.l.b16 %v286
    %v1036 = vunpack.c.h.b16 %v286
    %v1037 = vunpack.c.l.b16 %v287
    %v1038 = vunpack.c.h.b16 %v287
    %v1039 = vunpack.c.l.b16 %v288
    %v1040 = vunpack.c.h.b16 %v288
    %v1041 = vunpack.c.l.b16 %v289
    %v1042 = vunpack.c.h.b16 %v289
    %v1043 = vunpack.c.l.b16 %v290
    %v1044 = vunpack.c.h.b16 %v290
    %v1045 = vunpack.c.l.b16 %v291
    %v1046 = vunpack.c.h.b16 %v291
    %v1047 = vunpack.c.l.b16 %v292
    %v1048 = vunpack.c.h.b16 %v292
    %v1049 = vunpack.c.l.b16 %v293
    %v1050 = vunpack.c.h.b16 %v293
    %v1051 = vunpack.c.l.b16 %v294
    %v1052 = vunpack.c.h.b16 %v294
    %v1053 = vunpack.c.l.b16 %v295
    %v1054 = vunpack.c.h.b16 %v295
    %v1055 = vunpack.c.l.b16 %v296
    %v1056 = vunpack.c.h.b16 %v296
    %v1057 = vunpack.c.l.b16 %v297
    %v1058 = vunpack.c.h.b16 %v297
    %v1059 = vunpack.c.l.b16 %v298
    %v1060 = vunpack.c.h.b16 %v298
    %v1061 = vunpack.c.l.b16 %v299
    %v1062 = vunpack.c.h.b16 %v299
    %v1063 = vunpack.c.l.b16 %v300
    %v1064 = vunpack.c.h.b16 %v300
    %v1065 = vunpack.c.l.b16 %v301
    %v1066 = vunpack.c.h.b16 %v301
    %v1067 = vunpack.c.l.b16 %v302
    %v1068 = vunpack.c.h.b16 %v302
    %v1069 = vunpack.c.l.b16 %v303
    %v1070 = vunpack.c.h.b16 %v303
    %v1071 = vunpack.c.l.b16 %v304
    %v1072 = vunpack.c.h.b16 %v304
    %v1073 = vunpack.c.l.b16 %v305
    %v1074 = vunpack.c.h.b16 %v305
    %v1075 = vunpack.c.l.b16 %v306
    %v1076 = vunpack.c.h.b16 %v306
    %v1077 = vunpack.c.l.b16 %v307
    %v1078 = vunpack.c.h.b16 %v307
    %v1079 = vunpack.c.l.b16 %v308
    %v1080 = vunpack.c.h.b16 %v308
    %v1081 = vunpack.c.l.b16 %v309
    %v1082 = vunpack.c.h.b16 %v309
    %v1083 = vunpack.c.l.b16 %v310
    %v1084 = vunpack.c.h.b16 %v310
    %v1085 = vunpack.c.l.b16 %v311
    %v1086 = vunpack.c.h.b16 %v311
    %v1087 = vunpack.c.l.b16 %v312
    %v1088 = vunpack.c.h.b16 %v312
    %v1089 = vunpack.c.l.b16 %v313
    %v1090 = vunpack.c.h.b16 %v313
    %v1091 = vunpack.c.l.b16 %v314
    %v1092 = vunpack.c.h.b16 %v314
    %v1093 = vunpack.c.l.b16 %v315
    %v1094 = vunpack.c.h.b16 %v315
    %v1095 = vunpack.c.l.b16 %v316
    %v1096 = vunpack.c.h.b16 %v316
    %v1097 = vunpack.c.l.b16 %v317
    %v1098 = vunpack.c.h.b16 %v317
    %v1099 = vunpack.c.l.b16 %v318
    %v1100 = vunpack.c.h.b16 %v318
    %v1101 = vunpack.c.l.b16 %v319
    %v1102 = vunpack.c.h.b16 %v319
    %v1103 = vunpack.c.l.b16 %v320
    %v1104 = vunpack.c.h.b16 %v320
    %v1105 = vunpack.c.l.b16 %v321
    %v1106 = vunpack.c.h.b16 %v321
    %v1107 = vunpack.c.l.b16 %v322
    %v1108 = vunpack.c.h.b16 %v322
    %v1109 = vunpack.c.l.b16 %v323
    %v1110 = vunpack.c.h.b16 %v323
    %v1111 = vunpack.c.l.b16 %v324
    %v1112 = vunpack.c.h.b16 %v324
    %v1113 = vunpack.c.l.b16 %v325
    %v1114 = vunpack.c.h.b16 %v325
    %v1115 = vunpack.c.l.b16 %v326
    %v1116 = vunpack.c.h.b16 %v326
    %v1117 = vpack.c.b16 %v609, %v605
    %v1118 = vpack.c.b16 %v610, %v606
    %v1119 = vpack.c.b16 %v611, %v607
    %v1120 = vpack.c.b16 %v612, %v608
    %v1121 = vpack.c.b16 %v617, %v613
    %v1122 = vpack.c.b16 %v618, %v614
    %v1123 = vpack.c.b16 %v619, %v615
    %v1124 = vpack.c.b16 %v620, %v616
    %v1125 = vpack.c.b16 %v625, %v621
    %v1126 = vpack.c.b16 %v626, %v622
    %v1127 = vpack.c.b16 %v627, %v623
    %v1128 = vpack.c.b16 %v628, %v624
    %v1129 = vpack.c.b16 %v633, %v629
    %v1130 = vpack.c.b16 %v634, %v630
    %v1131 = vpack.c.b16 %v635, %v631
    %v1132 = vpack.c.b16 %v636, %v632
    %v1133 = vpack.c.b16 %v641, %v637
    %v1134 = vpack.c.b16 %v642, %v638
    %v1135 = vpack.c.b16 %v643, %v639
    %v1136 = vpack.c.b16 %v644, %v640
    %v1137 = vpack.c.b16 %v649, %v645
    %v1138 = vpack.c.b16 %v650, %v646
    %v1139 = vpack.c.b16 %v651, %v647
    %v1140 = vpack.c.b16 %v652, %v648
    %v1141 = vpack.c.b16 %v657, %v653
    %v1142 = vpack.c.b16 %v658, %v654
    %v1143 = vpack.c.b16 %v659, %v655
    %v1144 = vpack.c.b16 %v660, %v656
    %v1145 = vpack.c.b16 %v665, %v661
    %v1146 = vpack.c.b16 %v666, %v662
    %v1147 = vpack.c.b16 %v667, %v663
    %v1148 = vpack.c.b16 %v668, %v664
    %v1149 = vpack.c.b16 %v673, %v669
    %v1150 = vpack.c.b16 %v674, %v670
    %v1151 = vpack.c.b16 %v675, %v671
    %v1152 = vpack.c.b16 %v676, %v672
    %v1153 = vpack.c.b16 %v681, %v677
    %v1154 = vpack.c.b16 %v682, %v678
    %v1155 = vpack.c.b16 %v683, %v679
    %v1156 = vpack.c.b16 %v684, %v680
    %v1157 = vpack.c.b16 %v689, %v685
    %v1158 = vpack.c.b16 %v690, %v686
    %v1159 = vpack.c.b16 %v691, %v687
    %v1160 = vpack.c.b16 %v692, %v688
    %v1161 = vpack.c.b16 %v697, %v693
    %v1162 = vpack.c.b16 %v698, %v694
    %v1163 = vpack.c.b16 %v699, %v695
    %v1164 = vpack.c.b16 %v700, %v696
    %v1165 = vpack.c.b16 %v705, %v701
    %v1166 = vpack.c.b16 %v706, %v702
    %v1167 = vpack.c.b16 %v707, %v703
    %v1168 = vpack.c.b16 %v708, %v704
    %v1169 = vpack.c.b16 %v713, %v709
    %v1170 = vpack.c.b16 %v714, %v710
    %v1171 = vpack.c.b16 %v715, %v711
    %v1172 = vpack.c.b16 %v716, %v712
    %v1173 = vpack.c.b16 %v721, %v717
    %v1174 = vpack.c.b16 %v722, %v718
    %v1175 = vpack.c.b16 %v723, %v719
    %v1176 = vpack.c.b16 %v724, %v720
    %v1177 = vpack.c.b16 %v729, %v725
    %v1178 = vpack.c.b16 %v730, %v726
    %v1179 = vpack.c.b16 %v731, %v727
    %v1180 = vpack.c.b16 %v732, %v728
    %v1181 = vpack.c.b16 %v737, %v733
    %v1182 = vpack.c.b16 %v738, %v734
    %v1183 = vpack.c.b16 %v739, %v735
    %v1184 = vpack.c.b16 %v740, %v736
    %v1185 = vpack.c.b16 %v745, %v741
    %v1186 = vpack.c.b16 %v746, %v742
    %v1187 = vpack.c.b16 %v747, %v743
    %v1188 = vpack.c.b16 %v748, %v744
    %v1189 = vpack.c.b16 %v753, %v749
    %v1190 = vpack.c.b16 %v754, %v750
    %v1191 = vpack.c.b16 %v755, %v751
    %v1192 = vpack.c.b16 %v756, %v752
    %v1193 = vpack.c.b16 %v761, %v757
    %v1194 = vpack.c.b16 %v762, %v758
    %v1195 = vpack.c.b16 %v763, %v759
    %v1196 = vpack.c.b16 %v764, %v760
    %v1197 = vpack.c.b16 %v769, %v765
    %v1198 = vpack.c.b16 %v770, %v766
    %v1199 = vpack.c.b16 %v771, %v767
    %v1200 = vpack.c.b16 %v772, %v768
    %v1201 = vpack.c.b16 %v777, %v773
    %v1202 = vpack.c.b16 %v778, %v774
    %v1203 = vpack.c.b16 %v779, %v775
    %v1204 = vpack.c.b16 %v780, %v776
    %v1205 = vpack.c.b16 %v785, %v781
    %v1206 = vpack.c.b16 %v786, %v782
    %v1207 = vpack.c.b16 %v787, %v783
    %v1208 = vpack.c.b16 %v788, %v784
    %v1209 = vpack.c.b16 %v793, %v789
    %v1210 = vpack.c.b16 %v794, %v790
    %v1211 = vpack.c.b16 %v795, %v791
    %v1212 = vpack.c.b16 %v796, %v792
    %v1213 = vpack.c.b16 %v801, %v797
    %v1214 = vpack.c.b16 %v802, %v798
    %v1215 = vpack.c.b16 %v803, %v799
    %v1216 = vpack.c.b16 %v804, %v800
    %v1217 = vpack.c.b16 %v809, %v805
    %v1218 = vpack.c.b16 %v810, %v806
    %v1219 = vpack.c.b16 %v811, %v807
    %v1220 = vpack.c.b16 %v812, %v808
    %v1221 = vpack.c.b16 %v817, %v813
    %v1222 = vpack.c.b16 %v818, %v814
    %v1223 = vpack.c.b16 %v819, %v815
    %v1224 = vpack.c.b16 %v820, %v816
    %v1225 = vpack.c.b16 %v825, %v821
    %v1226 = vpack.c.b16 %v826, %v822
    %v1227 = vpack.c.b16 %v827, %v823
    %v1228 = vpack.c.b16 %v828, %v824
    %v1229 = vpack.c.b16 %v833, %v829
    %v1230 = vpack.c.b16 %v834, %v830
    %v1231 = vpack.c.b16 %v835, %v831
    %v1232 = vpack.c.b16 %v836, %v832
    %v1233 = vpack.c.b16 %v841, %v837
    %v1234 = vpack.c.b16 %v842, %v838
    %v1235 = vpack.c.b16 %v843, %v839
    %v1236 = vpack.c.b16 %v844, %v840
    %v1237 = vpack.c.b16 %v849, %v845
    %v1238 = vpack.c.b16 %v850, %v846
    %v1239 = vpack.c.b16 %v851, %v847
    %v1240 = vpack.c.b16 %v852, %v848
    %v1241 = vpack.c.b16 %v857, %v853
    %v1242 = vpack.c.b16 %v858, %v854
    %v1243 = vpack.c.b16 %v859, %v855
    %v1244 = vpack.c.b16 %v860, %v856
    %v1245 = vpack.c.b16 %v865, %v861
    %v1246 = vpack.c.b16 %v866, %v862
    %v1247 = vpack.c.b16 %v867, %v863
    %v1248 = vpack.c.b16 %v868, %v864
    %v1249 = vpack.c.b16 %v873, %v869
    %v1250 = vpack.c.b16 %v874, %v870
    %v1251 = vpack.c.b16 %v875, %v871
    %v1252 = vpack.c.b16 %v876, %v872
    %v1253 = vpack.c.b16 %v881, %v877
    %v1254 = vpack.c.b16 %v882, %v878
    %v1255 = vpack.c.b16 %v883, %v879
    %v1256 = vpack.c.b16 %v884, %v880
    %v1257 = vpack.c.b16 %v889, %v885
    %v1258 = vpack.c.b16 %v890, %v886
    %v1259 = vpack.c.b16 %v891, %v887
    %v1260 = vpack.c.b16 %v892, %v888
    %v1261 = vpack.c.b16 %v897, %v893
    %v1262 = vpack.c.b16 %v898, %v894
    %v1263 = vpack.c.b16 %v899, %v895
    %v1264 = vpack.c.b16 %v900, %v896
    %v1265 = vpack.c.b16 %v905, %v901
    %v1266 = vpack.c.b16 %v906, %v902
    %v1267 = vpack.c.b16 %v907, %v903
    %v1268 = vpack.c.b16 %v908, %v904
    %v1269 = vpack.c.b16 %v913, %v909
    %v1270 = vpack.c.b16 %v914, %v910
    %v1271 = vpack.c.b16 %v915, %v911
    %v1272 = vpack.c.b16 %v916, %v912
    %v1273 = vpack.c.b16 %v921, %v917
    %v1274 = vpack.c.b16 %v922, %v918
    %v1275 = vpack.c.b16 %v923, %v919
    %v1276 = vpack.c.b16 %v924, %v920
    %v1277 = vpack.c.b16 %v929, %v925
    %v1278 = vpack.c.b16 %v930, %v926
    %v1279 = vpack.c.b16 %v931, %v927
    %v1280 = vpack.c.b16 %v932, %v928
    %v1281 = vpack.c.b16 %v937, %v933
    %v1282 = vpack.c.b16 %v938, %v934
    %v1283 = vpack.c.b16 %v939, %v935
    %v1284 = vpack.c.b16 %v940, %v936
    %v1285 = vpack.c.b16 %v945, %v941
    %v1286 = vpack.c.b16 %v946, %v942
    %v1287 = vpack.c.b16 %v947, %v943
    %v1288 = vpack.c.b16 %v948, %v944
    %v1289 = vpack.c.b16 %v953, %v949
    %v1290 = vpack.c.b16 %v954, %v950
    %v1291 = vpack.c.b16 %v955, %v951
    %v1292 = vpack.c.b16 %v956, %v952
    %v1293 = vpack.c.b16 %v961, %v957
    %v1294 = vpack.c.b16 %v962, %v958
    %v1295 = vpack.c.b16 %v963, %v959
    %v1296 = vpack.c.b16 %v964, %v960
    %v1297 = vpack.c.b16 %v969, %v965
    %v1298 = vpack.c.b16 %v970, %v966
    %v1299 = vpack.c.b16 %v971, %v967
    %v1300 = vpack.c.b16 %v972, %v968
    %v1301 = vpack.c.b16 %v977, %v973
    %v1302 = vpack.c.b16 %v978, %v974
    %v1303 = vpack.c.b16 %v979, %v975
    %v1304 = vpack.c.b16 %v980, %v976
    %v1305 = vpack.c.b16 %v985, %v981
    %v1306 = vpack.c.b16 %v986, %v982
    %v1307 = vpack.c.b16 %v987, %v983
    %v1308 = vpack.c.b16 %v988, %v984
    %v1309 = vpack.c.b16 %v993, %v989
    %v1310 = vpack.c.b16 %v994, %v990
    %v1311 = vpack.c.b16 %v995, %v991
    %v1312 = vpack.c.b16 %v996, %v992
    %v1313 = vpack.c.b16 %v1001, %v997
    %v1314 = vpack.c.b16 %v1002, %v998
    %v1315 = vpack.c.b16 %v1003, %v999
    %v1316 = vpack.c.b16 %v1004, %v1000
    %v1317 = vpack.c.b16 %v1009, %v1005
    %v1318 = vpack.c.b16 %v1010, %v1006
    %v1319 = vpack.c.b16 %v1011, %v1007
    %v1320 = vpack.c.b16 %v1012, %v1008
    %v1321 = vpack.c.b16 %v1017, %v1013
    %v1322 = vpack.c.b16 %v1018, %v1014
    %v1323 = vpack.c.b16 %v1019, %v1015
    %v1324 = vpack.c.b16 %v1020, %v1016
    %v1325 = vpack.c.b16 %v1025, %v1021
    %v1326 = vpack.c.b16 %v1026, %v1022
    %v1327 = vpack.c.b16 %v1027, %v1023
    %v1328 = vpack.c.b16 %v1028, %v1024
    %v1329 = vpack.c.b16 %v1033, %v1029
    %v1330 = vpack.c.b16 %v1034, %v1030
    %v1331 = vpack.c.b16 %v1035, %v1031
    %v1332 = vpack.c.b16 %v1036, %v1032
    %v1333 = vpack.c.b16 %v1041, %v1037
    %v1334 = vpack.c.b16 %v1042, %v1038
    %v1335 = vpack.c.b16 %v1043, %v1039
    %v1336 = vpack.c.b16 %v1044, %v1040
    %v1337 = vpack.c.b16 %v1049, %v1045
    %v1338 = vpack.c.b16 %v1050, %v1046
    %v1339 = vpack.c.b16 %v1051, %v1047
    %v1340 = vpack.c.b16 %v1052, %v1048
    %v1341 = vpack.c.b16 %v1057, %v1053
    %v1342 = vpack.c.b16 %v1058, %v1054
    %v1343 = vpack.c.b16 %v1059, %v1055
    %v1344 = vpack.c.b16 %v1060, %v1056
    %v1345 = vpack.c.b16 %v1065, %v1061
    %v1346 = vpack.c.b16 %v1066, %v1062
    %v1347 = vpack.c.b16 %v1067, %v1063
    %v1348 = vpack.c.b16 %v1068, %v1064
    %v1349 = vpack.c.b16 %v1073, %v1069
    %v1350 = vpack.c.b16 %v1074, %v1070
    %v1351 = vpack.c.b16 %v1075, %v1071
    %v1352 = vpack.c.b16 %v1076, %v1072
    %v1353 = vpack.c.b16 %v1081, %v1077
    %v1354 = vpack.c.b16 %v1082, %v1078
    %v1355 = vpack.c.b16 %v1083, %v1079
    %v1356 = vpack.c.b16 %v1084, %v1080
    %v1357 = vpack.c.b16 %v1089, %v1085
    %v1358 = vpack.c.b16 %v1090, %v1086
    %v1359 = vpack.c.b16 %v1091, %v1087
    %v1360 = vpack.c.b16 %v1092, %v1088
    %v1361 = vpack.c.b16 %v1097, %v1093
    %v1362 = vpack.c.b16 %v1098, %v1094
    %v1363 = vpack.c.b16 %v1099, %v1095
    %v1364 = vpack.c.b16 %v1100, %v1096
    %v1365 = vpack.c.b16 %v1105, %v1101
    %v1366 = vpack.c.b16 %v1106, %v1102
    %v1367 = vpack.c.b16 %v1107, %v1103
    %v1368 = vpack.c.b16 %v1108, %v1104
    %v1369 = vpack.c.b16 %v1113, %v1109
    %v1370 = vpack.c.b16 %v1114, %v1110
    %v1371 = vpack.c.b16 %v1115, %v1111
    %v1372 = vpack.c.b16 %v1116, %v1112
    %1629 = vmatprep.subr.bf16.mxu0 %v1118
    %1630 = vmatpush1.bf16.msra.mxu0 %v1117
    %1631 = vmatprep.subr.bf16.mxu0 %v1122
    %1632 = vmatpush1.bf16.msra.mxu0 %v1121
    %1633 = vmatprep.subr.bf16.mxu0 %v1126
    %1634 = vmatpush1.bf16.msra.mxu0 %v1125
    %1635 = vmatprep.subr.bf16.mxu0 %v1130
    %1636 = vmatpush1.bf16.msra.mxu0 %v1129
    %1637 = vmatprep.subr.bf16.mxu0 %v1134
    %1638 = vmatpush1.bf16.msra.mxu0 %v1133
    %1639 = vmatprep.subr.bf16.mxu0 %v1138
    %1640 = vmatpush1.bf16.msra.mxu0 %v1137
    %1641 = vmatprep.subr.bf16.mxu0 %v1142
    %1642 = vmatpush1.bf16.msra.mxu0 %v1141
    %1643 = vmatprep.subr.bf16.mxu0 %v1146
    %1644 = vmatpush1.bf16.msra.mxu0 %v1145
    %1645 = vmatprep.subr.bf16.mxu0 %v1150
    %1646 = vmatpush1.bf16.msra.mxu0 %v1149
    %1647 = vmatprep.subr.bf16.mxu0 %v1154
    %1648 = vmatpush1.bf16.msra.mxu0 %v1153
    %1649 = vmatprep.subr.bf16.mxu0 %v1158
    %1650 = vmatpush1.bf16.msra.mxu0 %v1157
    %1651 = vmatprep.subr.bf16.mxu0 %v1162
    %1652 = vmatpush1.bf16.msra.mxu0 %v1161
    %1653 = vmatprep.subr.bf16.mxu0 %v1166
    %1654 = vmatpush1.bf16.msra.mxu0 %v1165
    %1655 = vmatprep.subr.bf16.mxu0 %v1170
    %1656 = vmatpush1.bf16.msra.mxu0 %v1169
    %1657 = vmatprep.subr.bf16.mxu0 %v1174
    %1658 = vmatpush1.bf16.msra.mxu0 %v1173
    %1659 = vmatprep.subr.bf16.mxu0 %v1178
    %1660 = vmatpush1.bf16.msra.mxu0 %v1177
    %1661 = vmatprep.mubr.bf16.mxu0 %v64
    %1662 = vmatmul.mubr.bf16.gmra.mrb[0].mxu0 %v63
    %v1663 = vpop.f32.mrb[0].mxu0
    %v1664 = vadd.f32 %v332, %v1663
    %v1665 = vpop.f32.mrb[0].mxu0
    %v1666 = vadd.f32 %v336, %v1665
    %v1667 = vpop.f32.mrb[0].mxu0
    %v1668 = vpop.f32.mrb[0].mxu0
    %1669 = vdwg.mxu0
    %1670 = vmatprep.subr.bf16.mxu0 %v1182
    %1671 = vmatpush1.bf16.msra.mxu0 %v1181
    %1672 = vmatprep.subr.bf16.mxu0 %v1186
    %1673 = vmatpush1.bf16.msra.mxu0 %v1185
    %1674 = vmatprep.subr.bf16.mxu0 %v1190
    %1675 = vmatpush1.bf16.msra.mxu0 %v1189
    %1676 = vmatprep.subr.bf16.mxu0 %v1194
    %1677 = vmatpush1.bf16.msra.mxu0 %v1193
    %1678 = vmatprep.subr.bf16.mxu0 %v1198
    %1679 = vmatpush1.bf16.msra.mxu0 %v1197
    %1680 = vmatprep.subr.bf16.mxu0 %v1202
    %1681 = vmatpush1.bf16.msra.mxu0 %v1201
    %1682 = vmatprep.subr.bf16.mxu0 %v1206
    %1683 = vmatpush1.bf16.msra.mxu0 %v1205
    %1684 = vmatprep.subr.bf16.mxu0 %v1210
    %1685 = vmatpush1.bf16.msra.mxu0 %v1209
    %1686 = vmatprep.subr.bf16.mxu0 %v1214
    %1687 = vmatpush1.bf16.msra.mxu0 %v1213
    %1688 = vmatprep.subr.bf16.mxu0 %v1218
    %1689 = vmatpush1.bf16.msra.mxu0 %v1217
    %1690 = vmatprep.subr.bf16.mxu0 %v1222
    %1691 = vmatpush1.bf16.msra.mxu0 %v1221
    %1692 = vmatprep.subr.bf16.mxu0 %v1226
    %1693 = vmatpush1.bf16.msra.mxu0 %v1225
    %1694 = vmatprep.subr.bf16.mxu0 %v1230
    %1695 = vmatpush1.bf16.msra.mxu0 %v1229
    %1696 = vmatprep.subr.bf16.mxu0 %v1234
    %1697 = vmatpush1.bf16.msra.mxu0 %v1233
    %1698 = vmatprep.subr.bf16.mxu0 %v1238
    %1699 = vmatpush1.bf16.msra.mxu0 %v1237
    %1700 = vmatprep.subr.bf16.mxu0 %v1242
    %1701 = vmatpush1.bf16.msra.mxu0 %v1241
    %1702 = vmatprep.mubr.bf16.mxu0 %v66
    %1703 = vmatmul.mubr.bf16.gmra.mrb[0].mxu0 %v65
    %v1704 = vpop.f32.mrb[0].mxu0
    %v1705 = vadd.f32 %v1664, %v1704
    %v1706 = vpop.f32.mrb[0].mxu0
    %v1707 = vadd.f32 %v1666, %v1706
    %v1708 = vpop.f32.mrb[0].mxu0
    %v1709 = vpop.f32.mrb[0].mxu0
    %1710 = vdwg.mxu0
    %1711 = vmatprep.subr.bf16.mxu0 %v1246
    %1712 = vmatpush1.bf16.msra.mxu0 %v1245
    %1713 = vmatprep.subr.bf16.mxu0 %v1250
    %1714 = vmatpush1.bf16.msra.mxu0 %v1249
    %1715 = vmatprep.subr.bf16.mxu0 %v1254
    %1716 = vmatpush1.bf16.msra.mxu0 %v1253
    %1717 = vmatprep.subr.bf16.mxu0 %v1258
    %1718 = vmatpush1.bf16.msra.mxu0 %v1257
    %1719 = vmatprep.subr.bf16.mxu0 %v1262
    %1720 = vmatpush1.bf16.msra.mxu0 %v1261
    %1721 = vmatprep.subr.bf16.mxu0 %v1266
    %1722 = vmatpush1.bf16.msra.mxu0 %v1265
    %1723 = vmatprep.subr.bf16.mxu0 %v1270
    %1724 = vmatpush1.bf16.msra.mxu0 %v1269
    %1725 = vmatprep.subr.bf16.mxu0 %v1274
    %1726 = vmatpush1.bf16.msra.mxu0 %v1273
    %1727 = vmatprep.subr.bf16.mxu0 %v1278
    %1728 = vmatpush1.bf16.msra.mxu0 %v1277
    %1729 = vmatprep.subr.bf16.mxu0 %v1282
    %1730 = vmatpush1.bf16.msra.mxu0 %v1281
    %1731 = vmatprep.subr.bf16.mxu0 %v1286
    %1732 = vmatpush1.bf16.msra.mxu0 %v1285
    %1733 = vmatprep.subr.bf16.mxu0 %v1290
    %1734 = vmatpush1.bf16.msra.mxu0 %v1289
    %1735 = vmatprep.subr.bf16.mxu0 %v1294
    %1736 = vmatpush1.bf16.msra.mxu0 %v1293
    %1737 = vmatprep.subr.bf16.mxu0 %v1298
    %1738 = vmatpush1.bf16.msra.mxu0 %v1297
    %1739 = vmatprep.subr.bf16.mxu0 %v1302
    %1740 = vmatpush1.bf16.msra.mxu0 %v1301
    %1741 = vmatprep.subr.bf16.mxu0 %v1306
    %1742 = vmatpush1.bf16.msra.mxu0 %v1305
    %1743 = vmatprep.mubr.bf16.mxu0 %v68
    %1744 = vmatmul.mubr.bf16.gmra.mrb[0].mxu0 %v67
    %v1745 = vpop.f32.mrb[0].mxu0
    %v1746 = vadd.f32 %v1705, %v1745
    %v1747 = vpop.f32.mrb[0].mxu0
    %v1748 = vadd.f32 %v1707, %v1747
    %v1749 = vpop.f32.mrb[0].mxu0
    %v1750 = vpop.f32.mrb[0].mxu0
    %1751 = vdwg.mxu0
    %1752 = vmatprep.subr.bf16.mxu0 %v1310
    %1753 = vmatpush1.bf16.msra.mxu0 %v1309
    %1754 = vmatprep.subr.bf16.mxu0 %v1314
    %1755 = vmatpush1.bf16.msra.mxu0 %v1313
    %1756 = vmatprep.subr.bf16.mxu0 %v1318
    %1757 = vmatpush1.bf16.msra.mxu0 %v1317
    %1758 = vmatprep.subr.bf16.mxu0 %v1322
    %1759 = vmatpush1.bf16.msra.mxu0 %v1321
    %1760 = vmatprep.subr.bf16.mxu0 %v1326
    %1761 = vmatpush1.bf16.msra.mxu0 %v1325
    %1762 = vmatprep.subr.bf16.mxu0 %v1330
    %1763 = vmatpush1.bf16.msra.mxu0 %v1329
    %1764 = vmatprep.subr.bf16.mxu0 %v1334
    %1765 = vmatpush1.bf16.msra.mxu0 %v1333
    %1766 = vmatprep.subr.bf16.mxu0 %v1338
    %1767 = vmatpush1.bf16.msra.mxu0 %v1337
    %1768 = vmatprep.subr.bf16.mxu0 %v1342
    %1769 = vmatpush1.bf16.msra.mxu0 %v1341
    %1770 = vmatprep.subr.bf16.mxu0 %v1346
    %1771 = vmatpush1.bf16.msra.mxu0 %v1345
    %1772 = vmatprep.subr.bf16.mxu0 %v1350
    %1773 = vmatpush1.bf16.msra.mxu0 %v1349
    %1774 = vmatprep.subr.bf16.mxu0 %v1354
    %1775 = vmatpush1.bf16.msra.mxu0 %v1353
    %1776 = vmatprep.subr.bf16.mxu0 %v1358
    %1777 = vmatpush1.bf16.msra.mxu0 %v1357
    %1778 = vmatprep.subr.bf16.mxu0 %v1362
    %1779 = vmatpush1.bf16.msra.mxu0 %v1361
    %1780 = vmatprep.subr.bf16.mxu0 %v1366
    %1781 = vmatpush1.bf16.msra.mxu0 %v1365
    %1782 = vmatprep.subr.bf16.mxu0 %v1370
    %1783 = vmatpush1.bf16.msra.mxu0 %v1369
    %1784 = vmatprep.mubr.bf16.mxu0 %v70
    %1785 = vmatmul.mubr.bf16.gmra.mrb[0].mxu0 %v69
    %v1786 = vpop.f32.mrb[0].mxu0
    %v1787 = vadd.f32 %v1746, %v1786
    %v1788 = vpop.f32.mrb[0].mxu0
    %v1789 = vadd.f32 %v1748, %v1788
    %v1790 = vpop.f32.mrb[0].mxu0
    %v1791 = vpop.f32.mrb[0].mxu0
    %1792 = vdwg.mxu0
    %1793 = vmatprep.subr.bf16.mxu0 %v1120
    %1794 = vmatpush1.bf16.msra.mxu0 %v1119
    %1795 = vmatprep.subr.bf16.mxu0 %v1124
    %1796 = vmatpush1.bf16.msra.mxu0 %v1123
    %1797 = vmatprep.subr.bf16.mxu0 %v1128
    %1798 = vmatpush1.bf16.msra.mxu0 %v1127
    %1799 = vmatprep.subr.bf16.mxu0 %v1132
    %1800 = vmatpush1.bf16.msra.mxu0 %v1131
    %1801 = vmatprep.subr.bf16.mxu0 %v1136
    %1802 = vmatpush1.bf16.msra.mxu0 %v1135
    %1803 = vmatprep.subr.bf16.mxu0 %v1140
    %1804 = vmatpush1.bf16.msra.mxu0 %v1139
    %1805 = vmatprep.subr.bf16.mxu0 %v1144
    %1806 = vmatpush1.bf16.msra.mxu0 %v1143
    %1807 = vmatprep.subr.bf16.mxu0 %v1148
    %1808 = vmatpush1.bf16.msra.mxu0 %v1147
    %1809 = vmatprep.subr.bf16.mxu0 %v1152
    %1810 = vmatpush1.bf16.msra.mxu0 %v1151
    %1811 = vmatprep.subr.bf16.mxu0 %v1156
    %1812 = vmatpush1.bf16.msra.mxu0 %v1155
    %1813 = vmatprep.subr.bf16.mxu0 %v1160
    %1814 = vmatpush1.bf16.msra.mxu0 %v1159
    %1815 = vmatprep.subr.bf16.mxu0 %v1164
    %1816 = vmatpush1.bf16.msra.mxu0 %v1163
    %1817 = vmatprep.subr.bf16.mxu0 %v1168
    %1818 = vmatpush1.bf16.msra.mxu0 %v1167
    %1819 = vmatprep.subr.bf16.mxu0 %v1172
    %1820 = vmatpush1.bf16.msra.mxu0 %v1171
    %1821 = vmatprep.subr.bf16.mxu0 %v1176
    %1822 = vmatpush1.bf16.msra.mxu0 %v1175
    %1823 = vmatprep.subr.bf16.mxu0 %v1180
    %1824 = vmatpush1.bf16.msra.mxu0 %v1179
    %1825 = vmatprep.mubr.bf16.mxu0 %v64
    %1826 = vmatmul.mubr.bf16.gmra.mrb[0].mxu0 %v63
    %v1827 = vpop.f32.mrb[0].mxu0
    %v1828 = vadd.f32 %v340, %v1827
    %v1829 = vpop.f32.mrb[0].mxu0
    %v1830 = vadd.f32 %v344, %v1829
    %v1831 = vpop.f32.mrb[0].mxu0
    %v1832 = vpop.f32.mrb[0].mxu0
    %1833 = vdwg.mxu0
    %1834 = vmatprep.subr.bf16.mxu0 %v1184
    %1835 = vmatpush1.bf16.msra.mxu0 %v1183
    %1836 = vmatprep.subr.bf16.mxu0 %v1188
    %1837 = vmatpush1.bf16.msra.mxu0 %v1187
    %1838 = vmatprep.subr.bf16.mxu0 %v1192
    %1839 = vmatpush1.bf16.msra.mxu0 %v1191
    %1840 = vmatprep.subr.bf16.mxu0 %v1196
    %1841 = vmatpush1.bf16.msra.mxu0 %v1195
    %1842 = vmatprep.subr.bf16.mxu0 %v1200
    %1843 = vmatpush1.bf16.msra.mxu0 %v1199
    %1844 = vmatprep.subr.bf16.mxu0 %v1204
    %1845 = vmatpush1.bf16.msra.mxu0 %v1203
    %1846 = vmatprep.subr.bf16.mxu0 %v1208
    %1847 = vmatpush1.bf16.msra.mxu0 %v1207
    %1848 = vmatprep.subr.bf16.mxu0 %v1212
    %1849 = vmatpush1.bf16.msra.mxu0 %v1211
    %1850 = vmatprep.subr.bf16.mxu0 %v1216
    %1851 = vmatpush1.bf16.msra.mxu0 %v1215
    %1852 = vmatprep.subr.bf16.mxu0 %v1220
    %1853 = vmatpush1.bf16.msra.mxu0 %v1219
    %1854 = vmatprep.subr.bf16.mxu0 %v1224
    %1855 = vmatpush1.bf16.msra.mxu0 %v1223
    %1856 = vmatprep.subr.bf16.mxu0 %v1228
    %1857 = vmatpush1.bf16.msra.mxu0 %v1227
    %1858 = vmatprep.subr.bf16.mxu0 %v1232
    %1859 = vmatpush1.bf16.msra.mxu0 %v1231
    %1860 = vmatprep.subr.bf16.mxu0 %v1236
    %1861 = vmatpush1.bf16.msra.mxu0 %v1235
    %1862 = vmatprep.subr.bf16.mxu0 %v1240
    %1863 = vmatpush1.bf16.msra.mxu0 %v1239
    %1864 = vmatprep.subr.bf16.mxu0 %v1244
    %1865 = vmatpush1.bf16.msra.mxu0 %v1243
    %1866 = vmatprep.mubr.bf16.mxu0 %v66
    %1867 = vmatmul.mubr.bf16.gmra.mrb[0].mxu0 %v65
    %v1868 = vpop.f32.mrb[0].mxu0
    %v1869 = vadd.f32 %v1828, %v1868
    %v1870 = vpop.f32.mrb[0].mxu0
    %v1871 = vadd.f32 %v1830, %v1870
    %v1872 = vpop.f32.mrb[0].mxu0
    %v1873 = vpop.f32.mrb[0].mxu0
    %1874 = vdwg.mxu0
    %1875 = vmatprep.subr.bf16.mxu0 %v1248
    %1876 = vmatpush1.bf16.msra.mxu0 %v1247
    %1877 = vmatprep.subr.bf16.mxu0 %v1252
    %1878 = vmatpush1.bf16.msra.mxu0 %v1251
    %1879 = vmatprep.subr.bf16.mxu0 %v1256
    %1880 = vmatpush1.bf16.msra.mxu0 %v1255
    %1881 = vmatprep.subr.bf16.mxu0 %v1260
    %1882 = vmatpush1.bf16.msra.mxu0 %v1259
    %1883 = vmatprep.subr.bf16.mxu0 %v1264
    %1884 = vmatpush1.bf16.msra.mxu0 %v1263
    %1885 = vmatprep.subr.bf16.mxu0 %v1268
    %1886 = vmatpush1.bf16.msra.mxu0 %v1267
    %1887 = vmatprep.subr.bf16.mxu0 %v1272
    %1888 = vmatpush1.bf16.msra.mxu0 %v1271
    %1889 = vmatprep.subr.bf16.mxu0 %v1276
    %1890 = vmatpush1.bf16.msra.mxu0 %v1275
    %1891 = vmatprep.subr.bf16.mxu0 %v1280
    %1892 = vmatpush1.bf16.msra.mxu0 %v1279
    %1893 = vmatprep.subr.bf16.mxu0 %v1284
    %1894 = vmatpush1.bf16.msra.mxu0 %v1283
    %1895 = vmatprep.subr.bf16.mxu0 %v1288
    %1896 = vmatpush1.bf16.msra.mxu0 %v1287
    %1897 = vmatprep.subr.bf16.mxu0 %v1292
    %1898 = vmatpush1.bf16.msra.mxu0 %v1291
    %1899 = vmatprep.subr.bf16.mxu0 %v1296
    %1900 = vmatpush1.bf16.msra.mxu0 %v1295
    %1901 = vmatprep.subr.bf16.mxu0 %v1300
    %1902 = vmatpush1.bf16.msra.mxu0 %v1299
    %1903 = vmatprep.subr.bf16.mxu0 %v1304
    %1904 = vmatpush1.bf16.msra.mxu0 %v1303
    %1905 = vmatprep.subr.bf16.mxu0 %v1308
    %1906 = vmatpush1.bf16.msra.mxu0 %v1307
    %1907 = vmatprep.mubr.bf16.mxu0 %v68
    %1908 = vmatmul.mubr.bf16.gmra.mrb[0].mxu0 %v67
    %v1909 = vpop.f32.mrb[0].mxu0
    %v1910 = vadd.f32 %v1869, %v1909
    %v1911 = vpop.f32.mrb[0].mxu0
    %v1912 = vadd.f32 %v1871, %v1911
    %v1913 = vpop.f32.mrb[0].mxu0
    %v1914 = vpop.f32.mrb[0].mxu0
    %1915 = vdwg.mxu0
    %1916 = vmatprep.subr.bf16.mxu0 %v1312
    %1917 = vmatpush1.bf16.msra.mxu0 %v1311
    %1918 = vmatprep.subr.bf16.mxu0 %v1316
    %1919 = vmatpush1.bf16.msra.mxu0 %v1315
    %1920 = vmatprep.subr.bf16.mxu0 %v1320
    %1921 = vmatpush1.bf16.msra.mxu0 %v1319
    %1922 = vmatprep.subr.bf16.mxu0 %v1324
    %1923 = vmatpush1.bf16.msra.mxu0 %v1323
    %1924 = vmatprep.subr.bf16.mxu0 %v1328
    %1925 = vmatpush1.bf16.msra.mxu0 %v1327
    %1926 = vmatprep.subr.bf16.mxu0 %v1332
    %1927 = vmatpush1.bf16.msra.mxu0 %v1331
    %1928 = vmatprep.subr.bf16.mxu0 %v1336
    %1929 = vmatpush1.bf16.msra.mxu0 %v1335
    %1930 = vmatprep.subr.bf16.mxu0 %v1340
    %1931 = vmatpush1.bf16.msra.mxu0 %v1339
    %1932 = vmatprep.subr.bf16.mxu0 %v1344
    %1933 = vmatpush1.bf16.msra.mxu0 %v1343
    %1934 = vmatprep.subr.bf16.mxu0 %v1348
    %1935 = vmatpush1.bf16.msra.mxu0 %v1347
    %1936 = vmatprep.subr.bf16.mxu0 %v1352
    %1937 = vmatpush1.bf16.msra.mxu0 %v1351
    %1938 = vmatprep.subr.bf16.mxu0 %v1356
    %1939 = vmatpush1.bf16.msra.mxu0 %v1355
    %1940 = vmatprep.subr.bf16.mxu0 %v1360
    %1941 = vmatpush1.bf16.msra.mxu0 %v1359
    %1942 = vmatprep.subr.bf16.mxu0 %v1364
    %1943 = vmatpush1.bf16.msra.mxu0 %v1363
    %1944 = vmatprep.subr.bf16.mxu0 %v1368
    %1945 = vmatpush1.bf16.msra.mxu0 %v1367
    %1946 = vmatprep.subr.bf16.mxu0 %v1372
    %1947 = vmatpush1.bf16.msra.mxu0 %v1371
    %1948 = vmatprep.mubr.bf16.mxu0 %v70
    %1949 = vmatmul.mubr.bf16.gmra.mrb[0].mxu0 %v69
    %v1950 = vpop.f32.mrb[0].mxu0
    %v1951 = vadd.f32 %v1910, %v1950
    %v1952 = vpop.f32.mrb[0].mxu0
    %v1953 = vadd.f32 %v1912, %v1952
    %v1954 = vpop.f32.mrb[0].mxu0
    %v1955 = vpop.f32.mrb[0].mxu0
    %1956 = vdwg.mxu0
    %v1957 = vmax.f32 %v1787, 0.0
    %v1958 = vmax.f32 %v1789, 0.0
    %v1959 = vmax.f32 %v1951, 0.0
    %v1960 = vmax.f32 %v1953, 0.0
    %v1961 = vpack.c.bf16 %v1957, %v1957
    %v1962 = vpack.c.bf16 %v1958, %v1958
    %v1963 = vpack.c.bf16 %v1959, %v1959
    %v1964 = vpack.c.bf16 %v1960, %v1960
    %v1965 = vld [vmem:[#allocation4] sm:$0xff]
    %v1966 = vld [vmem:[#allocation4 + $0x8] sm:$0xff]
    %v1967 = vld [vmem:[#allocation4 + $0x10] sm:$0xff]
    %v1968 = vld [vmem:[#allocation4 + $0x18] sm:$0xff]
    %v1969 = vld [vmem:[#allocation4 + $0x20] sm:$0xff]
    %v1970 = vld [vmem:[#allocation4 + $0x28] sm:$0xff]
    %v1971 = vld [vmem:[#allocation4 + $0x30] sm:$0xff]
    %v1972 = vld [vmem:[#allocation4 + $0x38] sm:$0xff]
    %v1973 = vld [vmem:[#allocation4 + $0x40] sm:$0xff]
    %v1974 = vld [vmem:[#allocation4 + $0x48] sm:$0xff]
    %v1975 = vld [vmem:[#allocation4 + $0x50] sm:$0xff]
    %v1976 = vld [vmem:[#allocation4 + $0x58] sm:$0xff]
    %v1977 = vld [vmem:[#allocation4 + $0x60] sm:$0xff]
    %v1978 = vld [vmem:[#allocation4 + $0x68] sm:$0xff]
    %v1979 = vld [vmem:[#allocation4 + $0x70] sm:$0xff]
    %v1980 = vld [vmem:[#allocation4 + $0x78] sm:$0xff]
    %v1981 = vld [vmem:[#allocation4 + $0x80] sm:$0xff]
    %v1982 = vld [vmem:[#allocation4 + $0x88] sm:$0xff]
    %v1983 = vld [vmem:[#allocation4 + $0x90] sm:$0xff]
    %v1984 = vld [vmem:[#allocation4 + $0x98] sm:$0xff]
    %v1985 = vld [vmem:[#allocation4 + $0xa0] sm:$0xff]
    %v1986 = vld [vmem:[#allocation4 + $0xa8] sm:$0xff]
    %v1987 = vld [vmem:[#allocation4 + $0xb0] sm:$0xff]
    %v1988 = vld [vmem:[#allocation4 + $0xb8] sm:$0xff]
    %v1989 = vld [vmem:[#allocation4 + $0xc0] sm:$0xff]
    %v1990 = vld [vmem:[#allocation4 + $0xc8] sm:$0xff]
    %v1991 = vld [vmem:[#allocation4 + $0xd0] sm:$0xff]
    %v1992 = vld [vmem:[#allocation4 + $0xd8] sm:$0xff]
    %v1993 = vld [vmem:[#allocation4 + $0xe0] sm:$0xff]
    %v1994 = vld [vmem:[#allocation4 + $0xe8] sm:$0xff]
    %v1995 = vld [vmem:[#allocation4 + $0xf0] sm:$0xff]
    %v1996 = vld [vmem:[#allocation4 + $0xf8] sm:$0xff]
    %v1997 = vld [vmem:[#allocation4 + $0x100] sm:$0xff]
    %v1998 = vld [vmem:[#allocation4 + $0x108] sm:$0xff]
    %v1999 = vld [vmem:[#allocation4 + $0x110] sm:$0xff]
    %v2000 = vld [vmem:[#allocation4 + $0x118] sm:$0xff]
    %v2001 = vld [vmem:[#allocation4 + $0x120] sm:$0xff]
    %v2002 = vld [vmem:[#allocation4 + $0x128] sm:$0xff]
    %v2003 = vld [vmem:[#allocation4 + $0x130] sm:$0xff]
    %v2004 = vld [vmem:[#allocation4 + $0x138] sm:$0xff]
    %v2005 = vld [vmem:[#allocation4 + $0x140] sm:$0xff]
    %v2006 = vld [vmem:[#allocation4 + $0x148] sm:$0xff]
    %v2007 = vld [vmem:[#allocation4 + $0x150] sm:$0xff]
    %v2008 = vld [vmem:[#allocation4 + $0x158] sm:$0xff]
    %v2009 = vld [vmem:[#allocation4 + $0x160] sm:$0xff]
    %v2010 = vld [vmem:[#allocation4 + $0x168] sm:$0xff]
    %v2011 = vld [vmem:[#allocation4 + $0x170] sm:$0xff]
    %v2012 = vld [vmem:[#allocation4 + $0x178] sm:$0xff]
    %v2013 = vld [vmem:[#allocation4 + $0x180] sm:$0xff]
    %v2014 = vld [vmem:[#allocation4 + $0x188] sm:$0xff]
    %v2015 = vld [vmem:[#allocation4 + $0x190] sm:$0xff]
    %v2016 = vld [vmem:[#allocation4 + $0x198] sm:$0xff]
    %v2017 = vld [vmem:[#allocation4 + $0x1a0] sm:$0xff]
    %v2018 = vld [vmem:[#allocation4 + $0x1a8] sm:$0xff]
    %v2019 = vld [vmem:[#allocation4 + $0x1b0] sm:$0xff]
    %v2020 = vld [vmem:[#allocation4 + $0x1b8] sm:$0xff]
    %v2021 = vld [vmem:[#allocation4 + $0x1c0] sm:$0xff]
    %v2022 = vld [vmem:[#allocation4 + $0x1c8] sm:$0xff]
    %v2023 = vld [vmem:[#allocation4 + $0x1d0] sm:$0xff]
    %v2024 = vld [vmem:[#allocation4 + $0x1d8] sm:$0xff]
    %v2025 = vld [vmem:[#allocation4 + $0x1e0] sm:$0xff]
    %v2026 = vld [vmem:[#allocation4 + $0x1e8] sm:$0xff]
    %v2027 = vld [vmem:[#allocation4 + $0x1f0] sm:$0xff]
    %v2028 = vld [vmem:[#allocation4 + $0x1f8] sm:$0xff]
    %v2029 = vld [vmem:[%s4] sm:$0x3]
    %v2031 = vlaneseq
    %v2032 = vshrl.u32 %v2031, 7
    %v2033 = vsub.s32 0, %v2032
    %v2034 = vrot.slane %v2029, %v2033
    %v2035 = vlaneseq
    %v2036 = vshrl.u32 %v2035, 7
    %v2037 = vsub.s32 1, %v2036
    %v2038 = vrot.slane %v2029, %v2037
    %v2105 = vunpack.c.l.b16 %v1965
    %v2106 = vunpack.c.h.b16 %v1965
    %v2107 = vunpack.c.l.b16 %v1966
    %v2108 = vunpack.c.h.b16 %v1966
    %v2109 = vunpack.c.l.b16 %v1967
    %v2110 = vunpack.c.h.b16 %v1967
    %v2111 = vunpack.c.l.b16 %v1968
    %v2112 = vunpack.c.h.b16 %v1968
    %v2113 = vunpack.c.l.b16 %v1969
    %v2114 = vunpack.c.h.b16 %v1969
    %v2115 = vunpack.c.l.b16 %v1970
    %v2116 = vunpack.c.h.b16 %v1970
    %v2117 = vunpack.c.l.b16 %v1971
    %v2118 = vunpack.c.h.b16 %v1971
    %v2119 = vunpack.c.l.b16 %v1972
    %v2120 = vunpack.c.h.b16 %v1972
    %v2121 = vunpack.c.l.b16 %v1973
    %v2122 = vunpack.c.h.b16 %v1973
    %v2123 = vunpack.c.l.b16 %v1974
    %v2124 = vunpack.c.h.b16 %v1974
    %v2125 = vunpack.c.l.b16 %v1975
    %v2126 = vunpack.c.h.b16 %v1975
    %v2127 = vunpack.c.l.b16 %v1976
    %v2128 = vunpack.c.h.b16 %v1976
    %v2129 = vunpack.c.l.b16 %v1977
    %v2130 = vunpack.c.h.b16 %v1977
    %v2131 = vunpack.c.l.b16 %v1978
    %v2132 = vunpack.c.h.b16 %v1978
    %v2133 = vunpack.c.l.b16 %v1979
    %v2134 = vunpack.c.h.b16 %v1979
    %v2135 = vunpack.c.l.b16 %v1980
    %v2136 = vunpack.c.h.b16 %v1980
    %v2137 = vunpack.c.l.b16 %v1981
    %v2138 = vunpack.c.h.b16 %v1981
    %v2139 = vunpack.c.l.b16 %v1982
    %v2140 = vunpack.c.h.b16 %v1982
    %v2141 = vunpack.c.l.b16 %v1983
    %v2142 = vunpack.c.h.b16 %v1983
    %v2143 = vunpack.c.l.b16 %v1984
    %v2144 = vunpack.c.h.b16 %v1984
    %v2145 = vunpack.c.l.b16 %v1985
    %v2146 = vunpack.c.h.b16 %v1985
    %v2147 = vunpack.c.l.b16 %v1986
    %v2148 = vunpack.c.h.b16 %v1986
    %v2149 = vunpack.c.l.b16 %v1987
    %v2150 = vunpack.c.h.b16 %v1987
    %v2151 = vunpack.c.l.b16 %v1988
    %v2152 = vunpack.c.h.b16 %v1988
    %v2153 = vunpack.c.l.b16 %v1989
    %v2154 = vunpack.c.h.b16 %v1989
    %v2155 = vunpack.c.l.b16 %v1990
    %v2156 = vunpack.c.h.b16 %v1990
    %v2157 = vunpack.c.l.b16 %v1991
    %v2158 = vunpack.c.h.b16 %v1991
    %v2159 = vunpack.c.l.b16 %v1992
    %v2160 = vunpack.c.h.b16 %v1992
    %v2161 = vunpack.c.l.b16 %v1993
    %v2162 = vunpack.c.h.b16 %v1993
    %v2163 = vunpack.c.l.b16 %v1994
    %v2164 = vunpack.c.h.b16 %v1994
    %v2165 = vunpack.c.l.b16 %v1995
    %v2166 = vunpack.c.h.b16 %v1995
    %v2167 = vunpack.c.l.b16 %v1996
    %v2168 = vunpack.c.h.b16 %v1996
    %v2169 = vunpack.c.l.b16 %v1997
    %v2170 = vunpack.c.h.b16 %v1997
    %v2171 = vunpack.c.l.b16 %v1998
    %v2172 = vunpack.c.h.b16 %v1998
    %v2173 = vunpack.c.l.b16 %v1999
    %v2174 = vunpack.c.h.b16 %v1999
    %v2175 = vunpack.c.l.b16 %v2000
    %v2176 = vunpack.c.h.b16 %v2000
    %v2177 = vunpack.c.l.b16 %v2001
    %v2178 = vunpack.c.h.b16 %v2001
    %v2179 = vunpack.c.l.b16 %v2002
    %v2180 = vunpack.c.h.b16 %v2002
    %v2181 = vunpack.c.l.b16 %v2003
    %v2182 = vunpack.c.h.b16 %v2003
    %v2183 = vunpack.c.l.b16 %v2004
    %v2184 = vunpack.c.h.b16 %v2004
    %v2185 = vunpack.c.l.b16 %v2005
    %v2186 = vunpack.c.h.b16 %v2005
    %v2187 = vunpack.c.l.b16 %v2006
    %v2188 = vunpack.c.h.b16 %v2006
    %v2189 = vunpack.c.l.b16 %v2007
    %v2190 = vunpack.c.h.b16 %v2007
    %v2191 = vunpack.c.l.b16 %v2008
    %v2192 = vunpack.c.h.b16 %v2008
    %v2193 = vunpack.c.l.b16 %v2009
    %v2194 = vunpack.c.h.b16 %v2009
    %v2195 = vunpack.c.l.b16 %v2010
    %v2196 = vunpack.c.h.b16 %v2010
    %v2197 = vunpack.c.l.b16 %v2011
    %v2198 = vunpack.c.h.b16 %v2011
    %v2199 = vunpack.c.l.b16 %v2012
    %v2200 = vunpack.c.h.b16 %v2012
    %v2201 = vunpack.c.l.b16 %v2013
    %v2202 = vunpack.c.h.b16 %v2013
    %v2203 = vunpack.c.l.b16 %v2014
    %v2204 = vunpack.c.h.b16 %v2014
    %v2205 = vunpack.c.l.b16 %v2015
    %v2206 = vunpack.c.h.b16 %v2015
    %v2207 = vunpack.c.l.b16 %v2016
    %v2208 = vunpack.c.h.b16 %v2016
    %v2209 = vunpack.c.l.b16 %v2017
    %v2210 = vunpack.c.h.b16 %v2017
    %v2211 = vunpack.c.l.b16 %v2018
    %v2212 = vunpack.c.h.b16 %v2018
    %v2213 = vunpack.c.l.b16 %v2019
    %v2214 = vunpack.c.h.b16 %v2019
    %v2215 = vunpack.c.l.b16 %v2020
    %v2216 = vunpack.c.h.b16 %v2020
    %v2217 = vunpack.c.l.b16 %v2021
    %v2218 = vunpack.c.h.b16 %v2021
    %v2219 = vunpack.c.l.b16 %v2022
    %v2220 = vunpack.c.h.b16 %v2022
    %v2221 = vunpack.c.l.b16 %v2023
    %v2222 = vunpack.c.h.b16 %v2023
    %v2223 = vunpack.c.l.b16 %v2024
    %v2224 = vunpack.c.h.b16 %v2024
    %v2225 = vunpack.c.l.b16 %v2025
    %v2226 = vunpack.c.h.b16 %v2025
    %v2227 = vunpack.c.l.b16 %v2026
    %v2228 = vunpack.c.h.b16 %v2026
    %v2229 = vunpack.c.l.b16 %v2027
    %v2230 = vunpack.c.h.b16 %v2027
    %v2231 = vunpack.c.l.b16 %v2028
    %v2232 = vunpack.c.h.b16 %v2028
    %v2233 = vpack.c.b16 %v2107, %v2105
    %v2234 = vpack.c.b16 %v2108, %v2106
    %v2235 = vpack.c.b16 %v2111, %v2109
    %v2236 = vpack.c.b16 %v2112, %v2110
    %v2237 = vpack.c.b16 %v2115, %v2113
    %v2238 = vpack.c.b16 %v2116, %v2114
    %v2239 = vpack.c.b16 %v2119, %v2117
    %v2240 = vpack.c.b16 %v2120, %v2118
    %v2241 = vpack.c.b16 %v2123, %v2121
    %v2242 = vpack.c.b16 %v2124, %v2122
    %v2243 = vpack.c.b16 %v2127, %v2125
    %v2244 = vpack.c.b16 %v2128, %v2126
    %v2245 = vpack.c.b16 %v2131, %v2129
    %v2246 = vpack.c.b16 %v2132, %v2130
    %v2247 = vpack.c.b16 %v2135, %v2133
    %v2248 = vpack.c.b16 %v2136, %v2134
    %v2249 = vpack.c.b16 %v2139, %v2137
    %v2250 = vpack.c.b16 %v2140, %v2138
    %v2251 = vpack.c.b16 %v2143, %v2141
    %v2252 = vpack.c.b16 %v2144, %v2142
    %v2253 = vpack.c.b16 %v2147, %v2145
    %v2254 = vpack.c.b16 %v2148, %v2146
    %v2255 = vpack.c.b16 %v2151, %v2149
    %v2256 = vpack.c.b16 %v2152, %v2150
    %v2257 = vpack.c.b16 %v2155, %v2153
    %v2258 = vpack.c.b16 %v2156, %v2154
    %v2259 = vpack.c.b16 %v2159, %v2157
    %v2260 = vpack.c.b16 %v2160, %v2158
    %v2261 = vpack.c.b16 %v2163, %v2161
    %v2262 = vpack.c.b16 %v2164, %v2162
    %v2263 = vpack.c.b16 %v2167, %v2165
    %v2264 = vpack.c.b16 %v2168, %v2166
    %v2265 = vpack.c.b16 %v2171, %v2169
    %v2266 = vpack.c.b16 %v2172, %v2170
    %v2267 = vpack.c.b16 %v2175, %v2173
    %v2268 = vpack.c.b16 %v2176, %v2174
    %v2269 = vpack.c.b16 %v2179, %v2177
    %v2270 = vpack.c.b16 %v2180, %v2178
    %v2271 = vpack.c.b16 %v2183, %v2181
    %v2272 = vpack.c.b16 %v2184, %v2182
    %v2273 = vpack.c.b16 %v2187, %v2185
    %v2274 = vpack.c.b16 %v2188, %v2186
    %v2275 = vpack.c.b16 %v2191, %v2189
    %v2276 = vpack.c.b16 %v2192, %v2190
    %v2277 = vpack.c.b16 %v2195, %v2193
    %v2278 = vpack.c.b16 %v2196, %v2194
    %v2279 = vpack.c.b16 %v2199, %v2197
    %v2280 = vpack.c.b16 %v2200, %v2198
    %v2281 = vpack.c.b16 %v2203, %v2201
    %v2282 = vpack.c.b16 %v2204, %v2202
    %v2283 = vpack.c.b16 %v2207, %v2205
    %v2284 = vpack.c.b16 %v2208, %v2206
    %v2285 = vpack.c.b16 %v2211, %v2209
    %v2286 = vpack.c.b16 %v2212, %v2210
    %v2287 = vpack.c.b16 %v2215, %v2213
    %v2288 = vpack.c.b16 %v2216, %v2214
    %v2289 = vpack.c.b16 %v2219, %v2217
    %v2290 = vpack.c.b16 %v2220, %v2218
    %v2291 = vpack.c.b16 %v2223, %v2221
    %v2292 = vpack.c.b16 %v2224, %v2222
    %v2293 = vpack.c.b16 %v2227, %v2225
    %v2294 = vpack.c.b16 %v2228, %v2226
    %v2295 = vpack.c.b16 %v2231, %v2229
    %v2296 = vpack.c.b16 %v2232, %v2230
    %2361 = vmatprep.subr.bf16.mxu0 %v2234
    %2362 = vmatpush1.bf16.msra.mxu0 %v2233
    %2363 = vmatprep.subr.bf16.mxu0 %v2236
    %2364 = vmatpush1.bf16.msra.mxu0 %v2235
    %2365 = vmatprep.subr.bf16.mxu0 %v2238
    %2366 = vmatpush1.bf16.msra.mxu0 %v2237
    %2367 = vmatprep.subr.bf16.mxu0 %v2240
    %2368 = vmatpush1.bf16.msra.mxu0 %v2239
    %2369 = vmatprep.subr.bf16.mxu0 %v2242
    %2370 = vmatpush1.bf16.msra.mxu0 %v2241
    %2371 = vmatprep.subr.bf16.mxu0 %v2244
    %2372 = vmatpush1.bf16.msra.mxu0 %v2243
    %2373 = vmatprep.subr.bf16.mxu0 %v2246
    %2374 = vmatpush1.bf16.msra.mxu0 %v2245
    %2375 = vmatprep.subr.bf16.mxu0 %v2248
    %2376 = vmatpush1.bf16.msra.mxu0 %v2247
    %2377 = vmatprep.subr.bf16.mxu0 %v2250
    %2378 = vmatpush1.bf16.msra.mxu0 %v2249
    %2379 = vmatprep.subr.bf16.mxu0 %v2252
    %2380 = vmatpush1.bf16.msra.mxu0 %v2251
    %2381 = vmatprep.subr.bf16.mxu0 %v2254
    %2382 = vmatpush1.bf16.msra.mxu0 %v2253
    %2383 = vmatprep.subr.bf16.mxu0 %v2256
    %2384 = vmatpush1.bf16.msra.mxu0 %v2255
    %2385 = vmatprep.subr.bf16.mxu0 %v2258
    %2386 = vmatpush1.bf16.msra.mxu0 %v2257
    %2387 = vmatprep.subr.bf16.mxu0 %v2260
    %2388 = vmatpush1.bf16.msra.mxu0 %v2259
    %2389 = vmatprep.subr.bf16.mxu0 %v2262
    %2390 = vmatpush1.bf16.msra.mxu0 %v2261
    %2391 = vmatprep.subr.bf16.mxu0 %v2264
    %2392 = vmatpush1.bf16.msra.mxu0 %v2263
    %2393 = vmatprep.mubr.bf16.mxu0 %v1962
    %2394 = vmatmul.mubr.bf16.gmra.mrb[0].mxu0 %v1961
    %v2395 = vpop.f32.mrb[0].mxu0
    %v2396 = vadd.f32 %v2034, %v2395
    %v2397 = vpop.f32.mrb[0].mxu0
    %v2398 = vadd.f32 %v2038, %v2397
    %v2399 = vpop.f32.mrb[0].mxu0
    %v2400 = vpop.f32.mrb[0].mxu0
    %2401 = vdwg.mxu0
    %2402 = vmatprep.subr.bf16.mxu0 %v2266
    %2403 = vmatpush1.bf16.msra.mxu0 %v2265
    %2404 = vmatprep.subr.bf16.mxu0 %v2268
    %2405 = vmatpush1.bf16.msra.mxu0 %v2267
    %2406 = vmatprep.subr.bf16.mxu0 %v2270
    %2407 = vmatpush1.bf16.msra.mxu0 %v2269
    %2408 = vmatprep.subr.bf16.mxu0 %v2272
    %2409 = vmatpush1.bf16.msra.mxu0 %v2271
    %2410 = vmatprep.subr.bf16.mxu0 %v2274
    %2411 = vmatpush1.bf16.msra.mxu0 %v2273
    %2412 = vmatprep.subr.bf16.mxu0 %v2276
    %2413 = vmatpush1.bf16.msra.mxu0 %v2275
    %2414 = vmatprep.subr.bf16.mxu0 %v2278
    %2415 = vmatpush1.bf16.msra.mxu0 %v2277
    %2416 = vmatprep.subr.bf16.mxu0 %v2280
    %2417 = vmatpush1.bf16.msra.mxu0 %v2279
    %2418 = vmatprep.subr.bf16.mxu0 %v2282
    %2419 = vmatpush1.bf16.msra.mxu0 %v2281
    %2420 = vmatprep.subr.bf16.mxu0 %v2284
    %2421 = vmatpush1.bf16.msra.mxu0 %v2283
    %2422 = vmatprep.subr.bf16.mxu0 %v2286
    %2423 = vmatpush1.bf16.msra.mxu0 %v2285
    %2424 = vmatprep.subr.bf16.mxu0 %v2288
    %2425 = vmatpush1.bf16.msra.mxu0 %v2287
    %2426 = vmatprep.subr.bf16.mxu0 %v2290
    %2427 = vmatpush1.bf16.msra.mxu0 %v2289
    %2428 = vmatprep.subr.bf16.mxu0 %v2292
    %2429 = vmatpush1.bf16.msra.mxu0 %v2291
    %2430 = vmatprep.subr.bf16.mxu0 %v2294
    %2431 = vmatpush1.bf16.msra.mxu0 %v2293
    %2432 = vmatprep.subr.bf16.mxu0 %v2296
    %2433 = vmatpush1.bf16.msra.mxu0 %v2295
    %2434 = vmatprep.mubr.bf16.mxu0 %v1964
    %2435 = vmatmul.mubr.bf16.gmra.mrb[0].mxu0 %v1963
    %v2436 = vpop.f32.mrb[0].mxu0
    %v2437 = vadd.f32 %v2396, %v2436
    %v2438 = vpop.f32.mrb[0].mxu0
    %v2439 = vadd.f32 %v2398, %v2438
    %v2440 = vpop.f32.mrb[0].mxu0
    %v2441 = vpop.f32.mrb[0].mxu0
    %2442 = vdwg.mxu0
    %v2443 = vmax.f32 %v2437, 0.0
    %v2444 = vmax.f32 %v2439, 0.0
    %v2445 = vpack.c.bf16 %v2443, %v2443
    %v2446 = vpack.c.bf16 %v2444, %v2444
    %v2447 = vld [vmem:[%s5] sm:$0xf]
    %v2448 = vld [vmem:[%s5 + $0x4] sm:$0xf]
    %v2449 = vld [vmem:[%s5 + $0x8] sm:$0xf]
    %v2450 = vld [vmem:[%s5 + $0xc] sm:$0xf]
    %v2451 = vld [vmem:[%s5 + $0x10] sm:$0xf]
    %v2452 = vld [vmem:[%s5 + $0x14] sm:$0xf]
    %v2453 = vld [vmem:[%s5 + $0x18] sm:$0xf]
    %v2454 = vld [vmem:[%s5 + $0x1c] sm:$0xf]
    %v2455 = vld [vmem:[%s5 + $0x20] sm:$0xf]
    %v2456 = vld [vmem:[%s5 + $0x24] sm:$0xf]
    %v2457 = vld [vmem:[%s5 + $0x28] sm:$0xf]
    %v2458 = vld [vmem:[%s5 + $0x2c] sm:$0xf]
    %v2459 = vld [vmem:[%s5 + $0x30] sm:$0xf]
    %v2460 = vld [vmem:[%s5 + $0x34] sm:$0xf]
    %v2461 = vld [vmem:[%s5 + $0x38] sm:$0xf]
    %v2462 = vld [vmem:[%s5 + $0x3c] sm:$0xf]
    %v2463 = vld [vmem:[%s5 + $0x40] sm:$0xf]
    %v2464 = vld [vmem:[%s5 + $0x44] sm:$0xf]
    %v2465 = vld [vmem:[%s5 + $0x48] sm:$0xf]
    %v2466 = vld [vmem:[%s5 + $0x4c] sm:$0xf]
    %v2467 = vld [vmem:[%s5 + $0x50] sm:$0xf]
    %v2468 = vld [vmem:[%s5 + $0x54] sm:$0xf]
    %v2469 = vld [vmem:[%s5 + $0x58] sm:$0xf]
    %v2470 = vld [vmem:[%s5 + $0x5c] sm:$0xf]
    %v2471 = vld [vmem:[%s5 + $0x60] sm:$0xf]
    %v2472 = vld [vmem:[%s5 + $0x64] sm:$0xf]
    %v2473 = vld [vmem:[%s5 + $0x68] sm:$0xf]
    %v2474 = vld [vmem:[%s5 + $0x6c] sm:$0xf]
    %v2475 = vld [vmem:[%s5 + $0x70] sm:$0xf]
    %v2476 = vld [vmem:[%s5 + $0x74] sm:$0xf]
    %v2477 = vld [vmem:[%s5 + $0x78] sm:$0xf]
    %v2478 = vld [vmem:[%s5 + $0x7c] sm:$0xf]
    %v2479 = vld [vmem:[%s6] sm:$0x1]
    %v2481 = vlaneseq
    %v2482 = vshrl.u32 %v2481, 7
    %v2483 = vsub.s32 0, %v2482
    %v2484 = vrot.slane %v2479, %v2483
    %v2518 = vunpack.c.l.b16 %v2447
    %v2519 = vunpack.c.l.b16 %v2448
    %v2520 = vunpack.c.l.b16 %v2449
    %v2521 = vunpack.c.l.b16 %v2450
    %v2522 = vunpack.c.l.b16 %v2451
    %v2523 = vunpack.c.l.b16 %v2452
    %v2524 = vunpack.c.l.b16 %v2453
    %v2525 = vunpack.c.l.b16 %v2454
    %v2526 = vunpack.c.l.b16 %v2455
    %v2527 = vunpack.c.l.b16 %v2456
    %v2528 = vunpack.c.l.b16 %v2457
    %v2529 = vunpack.c.l.b16 %v2458
    %v2530 = vunpack.c.l.b16 %v2459
    %v2531 = vunpack.c.l.b16 %v2460
    %v2532 = vunpack.c.l.b16 %v2461
    %v2533 = vunpack.c.l.b16 %v2462
    %v2534 = vunpack.c.l.b16 %v2463
    %v2535 = vunpack.c.l.b16 %v2464
    %v2536 = vunpack.c.l.b16 %v2465
    %v2537 = vunpack.c.l.b16 %v2466
    %v2538 = vunpack.c.l.b16 %v2467
    %v2539 = vunpack.c.l.b16 %v2468
    %v2540 = vunpack.c.l.b16 %v2469
    %v2541 = vunpack.c.l.b16 %v2470
    %v2542 = vunpack.c.l.b16 %v2471
    %v2543 = vunpack.c.l.b16 %v2472
    %v2544 = vunpack.c.l.b16 %v2473
    %v2545 = vunpack.c.l.b16 %v2474
    %v2546 = vunpack.c.l.b16 %v2475
    %v2547 = vunpack.c.l.b16 %v2476
    %v2548 = vunpack.c.l.b16 %v2477
    %v2549 = vunpack.c.l.b16 %v2478
    %v2550 = vpack.c.b16 %v2519, %v2518
    %v2551 = vpack.c.b16 %v2521, %v2520
    %v2552 = vpack.c.b16 %v2523, %v2522
    %v2553 = vpack.c.b16 %v2525, %v2524
    %v2554 = vpack.c.b16 %v2527, %v2526
    %v2555 = vpack.c.b16 %v2529, %v2528
    %v2556 = vpack.c.b16 %v2531, %v2530
    %v2557 = vpack.c.b16 %v2533, %v2532
    %v2558 = vpack.c.b16 %v2535, %v2534
    %v2559 = vpack.c.b16 %v2537, %v2536
    %v2560 = vpack.c.b16 %v2539, %v2538
    %v2561 = vpack.c.b16 %v2541, %v2540
    %v2562 = vpack.c.b16 %v2543, %v2542
    %v2563 = vpack.c.b16 %v2545, %v2544
    %v2564 = vpack.c.b16 %v2547, %v2546
    %v2565 = vpack.c.b16 %v2549, %v2548
    %2582 = vmatprep.subr.bf16.mxu0 0
    %2583 = vmatpush1.bf16.msra.mxu0 %v2550
    %2584 = vmatprep.subr.bf16.mxu0 0
    %2585 = vmatpush1.bf16.msra.mxu0 %v2551
    %2586 = vmatprep.subr.bf16.mxu0 0
    %2587 = vmatpush1.bf16.msra.mxu0 %v2552
    %2588 = vmatprep.subr.bf16.mxu0 0
    %2589 = vmatpush1.bf16.msra.mxu0 %v2553
    %2590 = vmatprep.subr.bf16.mxu0 0
    %2591 = vmatpush1.bf16.msra.mxu0 %v2554
    %2592 = vmatprep.subr.bf16.mxu0 0
    %2593 = vmatpush1.bf16.msra.mxu0 %v2555
    %2594 = vmatprep.subr.bf16.mxu0 0
    %2595 = vmatpush1.bf16.msra.mxu0 %v2556
    %2596 = vmatprep.subr.bf16.mxu0 0
    %2597 = vmatpush1.bf16.msra.mxu0 %v2557
    %2598 = vmatprep.subr.bf16.mxu0 0
    %2599 = vmatpush1.bf16.msra.mxu0 %v2558
    %2600 = vmatprep.subr.bf16.mxu0 0
    %2601 = vmatpush1.bf16.msra.mxu0 %v2559
    %2602 = vmatprep.subr.bf16.mxu0 0
    %2603 = vmatpush1.bf16.msra.mxu0 %v2560
    %2604 = vmatprep.subr.bf16.mxu0 0
    %2605 = vmatpush1.bf16.msra.mxu0 %v2561
    %2606 = vmatprep.subr.bf16.mxu0 0
    %2607 = vmatpush1.bf16.msra.mxu0 %v2562
    %2608 = vmatprep.subr.bf16.mxu0 0
    %2609 = vmatpush1.bf16.msra.mxu0 %v2563
    %2610 = vmatprep.subr.bf16.mxu0 0
    %2611 = vmatpush1.bf16.msra.mxu0 %v2564
    %2612 = vmatprep.subr.bf16.mxu0 0
    %2613 = vmatpush1.bf16.msra.mxu0 %v2565
    %2614 = vmatprep.mubr.bf16.mxu0 %v2446
    %2615 = vmatmul.mubr.bf16.gmra.mrb[0].mxu0 %v2445
    %v2616 = vpop.f32.mrb[0].mxu0
    %v2617 = vadd.f32 %v2484, %v2616
    %v2618 = vpop.f32.mrb[0].mxu0
    %v2619 = vpop.f32.mrb[0].mxu0
    %v2620 = vpop.f32.mrb[0].mxu0
    %2621 = vdwg.mxu0
    %2622 = vst [vmem:[%s7] sm:$0xff] %v2617
    // Predicated region
    $region38: #{causal_mlp_forward.1} parent=1 // pred_check
      _
    $region39: #{causal_mlp_forward.1} parent=1 // pred_check_branch
      %2624 = sbr.rel (0) target = $region41
    $region40: #{causal_mlp_forward.1} parent=1 // pred_region
      _
    $region41: #{causal_mlp_forward.1} parent=1 // pred_fallthru
      _
    // Predicated region
    $region42: #{causal_mlp_forward.1} parent=1 // pred_check
      _
    $region43: #{causal_mlp_forward.1} parent=1 // pred_check_branch
      %2626 = sbr.rel (0) target = $region45
    $region44: #{causal_mlp_forward.1} parent=1 // pred_region
      _
    $region45: #{causal_mlp_forward.1} parent=1 // pred_fallthru
      _
    %2627 = vsyncpa [#allocation3], 1
    %2628 = vsyncpa [#allocation5], 1

</llo_original>
